<compile_context>
chip_gen: v6e
topology: v6e:2x2x1
jax: 0.10.0
libtpu: 0.0.40
codegen_flags: <defaults>
</compile_context>

<pallas_src>
import jax
import jax.numpy as jnp
from jax import lax
from jax.experimental import pallas as pl
from jax.experimental.pallas import tpu as pltpu

IN_PLANES = 19
NUM_CHANNELS_CONV2D = 128      # real model: 256
NUM_RESIDUAL_LAYERS = 3        # real model: 40
BN_EPS = 1e-5
MATMUL_DTYPE = jnp.bfloat16    # MXU operand dtype (accumulation stays f32)

# TODO(synk): v7x dual-TensorCore split (Cout halved per core) needs a
# per-layer cross-core activation exchange; left out of this single-core version.


# ---------------------------------------------------------------------------
# Fused tower kernel: grid axis = conv index l (0 = stem, then conv1/conv2 of
# each residual layer).  All 3x3 convs are C->C (stem input zero-padded to C).
# ---------------------------------------------------------------------------
def _tower_kernel(x_ref, w_ref, g_ref, b_ref, out_ref, act_ref):
    l = pl.program_id(0)
    nconv = pl.num_programs(0)

    _, B, Hp, Wp, C = act_ref.shape
    H, W = Hp - 2, Wp - 2
    n = B * H * W

    # --- one-time init: zero both padded buffers, place input in buf 0 ------
    @pl.when(l == 0)
    def _init():
        act_ref[...] = jnp.zeros_like(act_ref)
        act_ref[0, :, 1:1 + H, 1:1 + W, :] = x_ref[...]

    src = l % 2          # buffer holding this conv's input
    dst = 1 - src        # buffer receiving this conv's output

    # --- 3x3 conv as 9 accumulated MXU matmuls (no im2col patch buffer) -----
    acc = jnp.zeros((n, C), jnp.float32)
    k = 0
    for dy in range(3):
        for dx in range(3):
            tap = act_ref[src, :, dy:dy + H, dx:dx + W, :]        # (B,H,W,C) f32
            tap = tap.reshape(n, C).astype(w_ref.dtype)           # bf16 operand
            w_k = w_ref[0, k * C:(k + 1) * C, :]                  # (C, C) bf16
            acc = acc + jnp.dot(tap, w_k,
                                preferred_element_type=jnp.float32)
            k += 1

    # --- BatchNorm (training-mode batch stats) folded to one affine pass ----
    inv_n = 1.0 / n
    s1 = jnp.sum(acc, axis=0, keepdims=True)
    s2 = jnp.sum(acc * acc, axis=0, keepdims=True)
    mean = s1 * inv_n
    var = s2 * inv_n - mean * mean
    scale = g_ref[0] * lax.rsqrt(var + BN_EPS)     # (1, C)
    shift = b_ref[0] - mean * scale                # (1, C)
    y = acc * scale + shift

    # --- residual add on the 2nd conv of each residual layer (even l >= 2) --
    # buf[dst] currently holds the input of the previous conv == the residual.
    add_res = jnp.logical_and(l >= 2, (l % 2) == 0).astype(jnp.float32)
    res = act_ref[dst, :, 1:1 + H, 1:1 + W, :].reshape(n, C)
    y = y + res * add_res

    # --- ReLU + write next-layer activation (interior of padded buffer) -----
    y = jnp.maximum(y, 0.0)
    y4 = y.reshape(B, H, W, C)
    act_ref[dst, :, 1:1 + H, 1:1 + W, :] = y4

    @pl.when(l == nconv - 1)
    def _final():
        out_ref[...] = y4


# ---------------------------------------------------------------------------
# Wrapper: stack weights / BN params, run the single fused pallas_call
# ---------------------------------------------------------------------------
def backbone_forward(params, x_nchw):
    C = NUM_CHANNELS_CONV2D
    L = NUM_RESIDUAL_LAYERS
    nconv = 1 + 2 * L
    B, _, H, W = x_nchw.shape

    # NCHW -> NHWC, zero-pad input planes 19 -> C so every conv is C -> C.
    x = jnp.transpose(x_nchw, (0, 2, 3, 1)).astype(jnp.float32)
    x = jnp.pad(x, ((0, 0), (0, 0), (0, 0), (0, C - x.shape[-1])))

    # Stacked im2col weights (nconv, 9C, C); stem Cin zero-padded 19 -> C.
    # (Conv bias is dropped: cancelled exactly by training-mode BN mean sub.)
    w0 = jnp.pad(params["conv0_w"],
                 ((0, 0), (0, 0), (0, C - IN_PLANES), (0, 0)))
    ws = [w0.reshape(9 * C, C)]
    gs = [params["bn0_g"]]
    bs = [params["bn0_b"]]
    for i in range(L):
        ws.append(params[f"res{i}_w1"].reshape(9 * C, C))
        gs.append(params[f"res{i}_bn1_g"])
        bs.append(params[f"res{i}_bn1_b"])
        ws.append(params[f"res{i}_w2"].reshape(9 * C, C))
        gs.append(params[f"res{i}_bn2_g"])
        bs.append(params[f"res{i}_bn2_b"])
    w_all = jnp.stack(ws).astype(MATMUL_DTYPE)               # (nconv, 9C, C)
    g_all = jnp.stack(gs).astype(jnp.float32)[:, None, :]    # (nconv, 1, C)
    b_all = jnp.stack(bs).astype(jnp.float32)[:, None, :]    # (nconv, 1, C)

    out_nhwc = pl.pallas_call(
        _tower_kernel,
        out_shape=jax.ShapeDtypeStruct((B, H, W, C), jnp.float32),
        grid_spec=pltpu.PrefetchScalarGridSpec(
            num_scalar_prefetch=0,
            grid=(nconv,),
            in_specs=[
                pl.BlockSpec((B, H, W, C), lambda l: (0, 0, 0, 0)),   # input
                pl.BlockSpec((1, 9 * C, C), lambda l: (l, 0, 0)),     # weights
                pl.BlockSpec((1, 1, C), lambda l: (l, 0, 0)),         # gamma
                pl.BlockSpec((1, 1, C), lambda l: (l, 0, 0)),         # beta
            ],
            out_specs=pl.BlockSpec((B, H, W, C), lambda l: (0, 0, 0, 0)),
            scratch_shapes=[
                pltpu.VMEM((2, B, H + 2, W + 2, C), jnp.float32),     # ping-pong
            ],
        ),
        compiler_params=pltpu.CompilerParams(
            dimension_semantics=("arbitrary",),
            vmem_limit_bytes=32 * 1024 * 1024),
    )(x, w_all, g_all, b_all)

    return jnp.transpose(out_nhwc, (0, 3, 1, 2))             # NHWC -> NCHW


# ---------------------------------------------------------------------------
# Parameter construction (deterministic, synthetic)
# ---------------------------------------------------------------------------
def init_params(key):
    params = {}
    C = NUM_CHANNELS_CONV2D

    def nxt():
        nonlocal key
        key, sub = jax.random.split(key)
        return sub

    params["conv0_w"] = 0.1 * jax.random.normal(nxt(), (3, 3, IN_PLANES, C), jnp.float32)
    params["conv0_b"] = 0.1 * jax.random.normal(nxt(), (C,), jnp.float32)
    params["bn0_g"] = jnp.ones((C,), jnp.float32)
    params["bn0_b"] = jnp.zeros((C,), jnp.float32)
    for i in range(NUM_RESIDUAL_LAYERS):
        params[f"res{i}_w1"] = 0.1 * jax.random.normal(nxt(), (3, 3, C, C), jnp.float32)
        params[f"res{i}_w2"] = 0.1 * jax.random.normal(nxt(), (3, 3, C, C), jnp.float32)
        params[f"res{i}_bn1_g"] = jnp.ones((C,), jnp.float32)
        params[f"res{i}_bn1_b"] = jnp.zeros((C,), jnp.float32)
        params[f"res{i}_bn2_g"] = jnp.ones((C,), jnp.float32)
        params[f"res{i}_bn2_b"] = jnp.zeros((C,), jnp.float32)
    return params


# ---------------------------------------------------------------------------
# Pure-JAX reference (precision-matched: conv operands rounded to MATMUL_DTYPE,
# accumulation / BN / residual in f32, exactly like the kernel).  The stem conv
# bias IS applied here, to validate that dropping it in the kernel is a no-op.
# ---------------------------------------------------------------------------
def _ref_conv_bn(x_nchw, w_hwio, bias, gamma, beta, residual=None):
    xc = x_nchw.astype(MATMUL_DTYPE).astype(jnp.float32)
    wc = w_hwio.astype(MATMUL_DTYPE).astype(jnp.float32)
    w_oihw = jnp.transpose(wc, (3, 2, 0, 1))
    y = lax.conv_general_dilated(xc, w_oihw, (1, 1), "SAME",
                                 dimension_numbers=("NCHW", "OIHW", "NCHW"),
                                 precision=lax.Precision.HIGHEST)
    if bias is not None:
        y = y + bias[None, :, None, None]
    mean = jnp.mean(y, axis=(0, 2, 3), keepdims=True)
    var = jnp.mean((y - mean) ** 2, axis=(0, 2, 3), keepdims=True)
    y = (y - mean) * lax.rsqrt(var + BN_EPS) * gamma[None, :, None, None] \
        + beta[None, :, None, None]
    if residual is not None:
        y = y + residual
    return jnp.maximum(y, 0.0)


def backbone_forward_ref(params, x_nchw):
    x = _ref_conv_bn(x_nchw, params["conv0_w"], params["conv0_b"],
                     params["bn0_g"], params["bn0_b"])
    for i in range(NUM_RESIDUAL_LAYERS):
        res = x
        x = _ref_conv_bn(x, params[f"res{i}_w1"], None,
                         params[f"res{i}_bn1_g"], params[f"res{i}_bn1_b"])
        x = _ref_conv_bn(x, params[f"res{i}_w2"], None,
                         params[f"res{i}_bn2_g"], params[f"res{i}_bn2_b"],
                         residual=res)
    return x


# ---------------------------------------------------------------------------
if __name__ == "__main__":
    key = jax.random.PRNGKey(0)
    k_params, k_x = jax.random.split(key)

    params = init_params(k_params)
    x = jax.random.normal(k_x, (2, IN_PLANES, 8, 8), jnp.float32)  # NCHW board

    out = jax.block_until_ready(jax.jit(backbone_forward)(params, x))
    ref = jax.block_until_ready(jax.jit(backbone_forward_ref)(params, x))

    assert out.shape == (2, NUM_CHANNELS_CONV2D, 8, 8), out.shape
    err = float(jnp.max(jnp.abs(out - ref)))
    assert err < 1e-2, err

    print("KERNEL_OK")
</pallas_src>

<mosaic_0001>
module attributes {stable_mosaic.version = 11 : i64} {
  func.func @_tower_kernel(%arg0: i32, %arg1: memref<2x8x8x128xf32, #tpu.memory_space<vmem>>, %arg2: memref<1x1152x128xbf16, #tpu.memory_space<vmem>>, %arg3: memref<1x1x128xf32, #tpu.memory_space<vmem>>, %arg4: memref<1x1x128xf32, #tpu.memory_space<vmem>>, %arg5: memref<2x8x8x128xf32, #tpu.memory_space<vmem>>, %arg6: memref<2x2x10x10x128xf32, #tpu.memory_space<vmem>>) attributes {dimension_semantics = [#tpu.dimension_semantics<arbitrary>], iteration_bounds = array<i64: 7>, scalar_prefetch = 0 : i64, scratch_operands = 1 : i64, tpu.core_type = #tpu.core_type<tc>, window_params = [{pipeline_mode = #tpu.pipeline_mode<synchronous>, transform_indices = @transform_0, window_bounds = array<i64: 2, 8, 8, 128>}, {transform_indices = @transform_1, window_bounds = array<i64: 1, 1152, 128>}, {transform_indices = @transform_2, window_bounds = array<i64: 1, 1, 128>}, {transform_indices = @transform_3, window_bounds = array<i64: 1, 1, 128>}, {pipeline_mode = #tpu.pipeline_mode<synchronous>, transform_indices = @transform_4, window_bounds = array<i64: 2, 8, 8, 128>}]} {
    %c0_i32 = arith.constant 0 : i32
    %0 = arith.cmpi eq, %arg0, %c0_i32 : i32
    %1 = arith.extui %0 : i1 to i32
    %c0_i32_0 = arith.constant 0 : i32
    %2 = arith.cmpi ne, %1, %c0_i32_0 : i32
    scf.if %2 {
      %cst_96 = arith.constant 0.000000e+00 : f32
      %153 = vector.broadcast %cst_96 : f32 to vector<2x2x10x10x128xf32>
      %c0_97 = arith.constant 0 : index
      %c0_98 = arith.constant 0 : index
      %c0_99 = arith.constant 0 : index
      %c0_100 = arith.constant 0 : index
      %c0_101 = arith.constant 0 : index
      %154 = vector.load %arg6[%c0_97, %c0_98, %c0_99, %c0_100, %c0_101] : memref<2x2x10x10x128xf32, #tpu.memory_space<vmem>>, vector<2x2x10x10x128xf32>
      tpu.vector_store %arg6[%c0_97, %c0_98, %c0_99, %c0_100, %c0_101], %153 {strides = array<i32>} : memref<2x2x10x10x128xf32, #tpu.memory_space<vmem>>, vector<2x2x10x10x128xf32>,
      %c0_102 = arith.constant 0 : index
      %c0_103 = arith.constant 0 : index
      %c0_104 = arith.constant 0 : index
      %c0_105 = arith.constant 0 : index
      %155 = vector.load %arg1[%c0_102, %c0_103, %c0_104, %c0_105] : memref<2x8x8x128xf32, #tpu.memory_space<vmem>>, vector<2x8x8x128xf32>
      %c0_106 = arith.constant 0 : index
      %c0_107 = arith.constant 0 : index
      %c1_108 = arith.constant 1 : index
      %c1_109 = arith.constant 1 : index
      %c0_110 = arith.constant 0 : index
      %156 = vector.load %arg6[%c0_106, %c0_107, %c1_108, %c1_109, %c0_110] : memref<2x2x10x10x128xf32, #tpu.memory_space<vmem>>, vector<1x2x8x8x128xf32>
      %157 = vector.shape_cast %156 : vector<1x2x8x8x128xf32> to vector<2x8x8x128xf32>
      %158 = vector.shape_cast %155 : vector<2x8x8x128xf32> to vector<1x2x8x8x128xf32>
      tpu.vector_store %arg6[%c0_106, %c0_107, %c1_108, %c1_109, %c0_110], %158 {strides = array<i32>} : memref<2x2x10x10x128xf32, #tpu.memory_space<vmem>>, vector<1x2x8x8x128xf32>,
    } else {
    }
    %c2_i32 = arith.constant 2 : i32
    %c0_i32_1 = arith.constant 0 : i32
    %3 = arith.cmpi eq, %c2_i32, %c0_i32_1 : i32
    %c1_i32 = arith.constant 1 : i32
    %4 = arith.select %3, %c1_i32, %c2_i32 : i32
    %5 = arith.remsi %arg0, %4 : i32
    %c0_i32_2 = arith.constant 0 : i32
    %6 = arith.cmpi ne, %5, %c0_i32_2 : i32
    %c0_i32_3 = arith.constant 0 : i32
    %7 = arith.cmpi slt, %5, %c0_i32_3 : i32
    %c0_i32_4 = arith.constant 0 : i32
    %8 = arith.cmpi slt, %4, %c0_i32_4 : i32
    %9 = arith.xori %7, %8 : i1
    %10 = arith.andi %9, %6 : i1
    %11 = arith.addi %5, %4 : i32
    %12 = arith.select %10, %11, %5 : i32
    %c1_i32_5 = arith.constant 1 : i32
    %13 = arith.subi %c1_i32_5, %12 : i32
    %cst = arith.constant 0.000000e+00 : f32
    %14 = vector.broadcast %cst : f32 to vector<128x128xf32>
    %15 = arith.index_cast %12 : i32 to index
    %c0 = arith.constant 0 : index
    %c0_6 = arith.constant 0 : index
    %c0_7 = arith.constant 0 : index
    %c0_8 = arith.constant 0 : index
    %16 = vector.load %arg6[%15, %c0, %c0_6, %c0_7, %c0_8] : memref<2x2x10x10x128xf32, #tpu.memory_space<vmem>>, vector<1x2x8x8x128xf32>
    %17 = vector.shape_cast %16 : vector<1x2x8x8x128xf32> to vector<2x8x8x128xf32>
    %18 = vector.shape_cast %17 : vector<2x8x8x128xf32> to vector<128x128xf32>
    %19 = arith.truncf %18 : vector<128x128xf32> to vector<128x128xbf16>
    %c0_9 = arith.constant 0 : index
    %c0_10 = arith.constant 0 : index
    %c0_11 = arith.constant 0 : index
    %20 = vector.load %arg2[%c0_9, %c0_10, %c0_11] : memref<1x1152x128xbf16, #tpu.memory_space<vmem>>, vector<1x128x128xbf16>
    %21 = vector.shape_cast %20 : vector<1x128x128xbf16> to vector<128x128xbf16>
    %cst_12 = arith.constant dense<0.000000e+00> : vector<128x128xf32>
    %22 = tpu.matmul %19, %21, %cst_12 {dimension_numbers = #tpu.dot_dimension_numbers<[1], [0], [0], [1], [0, 0, 1, 1], [], []>} : vector<128x128xbf16>, vector<128x128xbf16>, vector<128x128xf32> -> vector<128x128xf32>
    %23 = arith.addf %14, %22 : vector<128x128xf32>
    %24 = arith.index_cast %12 : i32 to index
    %c0_13 = arith.constant 0 : index
    %c0_14 = arith.constant 0 : index
    %c1 = arith.constant 1 : index
    %c0_15 = arith.constant 0 : index
    %25 = vector.load %arg6[%24, %c0_13, %c0_14, %c1, %c0_15] : memref<2x2x10x10x128xf32, #tpu.memory_space<vmem>>, vector<1x2x8x8x128xf32>
    %26 = vector.shape_cast %25 : vector<1x2x8x8x128xf32> to vector<2x8x8x128xf32>
    %27 = vector.shape_cast %26 : vector<2x8x8x128xf32> to vector<128x128xf32>
    %28 = arith.truncf %27 : vector<128x128xf32> to vector<128x128xbf16>
    %c0_16 = arith.constant 0 : index
    %c128 = arith.constant 128 : index
    %c0_17 = arith.constant 0 : index
    %29 = vector.load %arg2[%c0_16, %c128, %c0_17] : memref<1x1152x128xbf16, #tpu.memory_space<vmem>>, vector<1x128x128xbf16>
    %30 = vector.shape_cast %29 : vector<1x128x128xbf16> to vector<128x128xbf16>
    %cst_18 = arith.constant dense<0.000000e+00> : vector<128x128xf32>
    %31 = tpu.matmul %28, %30, %cst_18 {dimension_numbers = #tpu.dot_dimension_numbers<[1], [0], [0], [1], [0, 0, 1, 1], [], []>} : vector<128x128xbf16>, vector<128x128xbf16>, vector<128x128xf32> -> vector<128x128xf32>
    %32 = arith.addf %23, %31 : vector<128x128xf32>
    %33 = arith.index_cast %12 : i32 to index
    %c0_19 = arith.constant 0 : index
    %c0_20 = arith.constant 0 : index
    %c2 = arith.constant 2 : index
    %c0_21 = arith.constant 0 : index
    %34 = vector.load %arg6[%33, %c0_19, %c0_20, %c2, %c0_21] : memref<2x2x10x10x128xf32, #tpu.memory_space<vmem>>, vector<1x2x8x8x128xf32>
    %35 = vector.shape_cast %34 : vector<1x2x8x8x128xf32> to vector<2x8x8x128xf32>
    %36 = vector.shape_cast %35 : vector<2x8x8x128xf32> to vector<128x128xf32>
    %37 = arith.truncf %36 : vector<128x128xf32> to vector<128x128xbf16>
    %c0_22 = arith.constant 0 : index
    %c256 = arith.constant 256 : index
    %c0_23 = arith.constant 0 : index
    %38 = vector.load %arg2[%c0_22, %c256, %c0_23] : memref<1x1152x128xbf16, #tpu.memory_space<vmem>>, vector<1x128x128xbf16>
    %39 = vector.shape_cast %38 : vector<1x128x128xbf16> to vector<128x128xbf16>
    %cst_24 = arith.constant dense<0.000000e+00> : vector<128x128xf32>
    %40 = tpu.matmul %37, %39, %cst_24 {dimension_numbers = #tpu.dot_dimension_numbers<[1], [0], [0], [1], [0, 0, 1, 1], [], []>} : vector<128x128xbf16>, vector<128x128xbf16>, vector<128x128xf32> -> vector<128x128xf32>
    %41 = arith.addf %32, %40 : vector<128x128xf32>
    %42 = arith.index_cast %12 : i32 to index
    %c0_25 = arith.constant 0 : index
    %c1_26 = arith.constant 1 : index
    %c0_27 = arith.constant 0 : index
    %c0_28 = arith.constant 0 : index
    %43 = vector.load %arg6[%42, %c0_25, %c1_26, %c0_27, %c0_28] : memref<2x2x10x10x128xf32, #tpu.memory_space<vmem>>, vector<1x2x8x8x128xf32>
    %44 = vector.shape_cast %43 : vector<1x2x8x8x128xf32> to vector<2x8x8x128xf32>
    %45 = vector.shape_cast %44 : vector<2x8x8x128xf32> to vector<128x128xf32>
    %46 = arith.truncf %45 : vector<128x128xf32> to vector<128x128xbf16>
    %c0_29 = arith.constant 0 : index
    %c384 = arith.constant 384 : index
    %c0_30 = arith.constant 0 : index
    %47 = vector.load %arg2[%c0_29, %c384, %c0_30] : memref<1x1152x128xbf16, #tpu.memory_space<vmem>>, vector<1x128x128xbf16>
    %48 = vector.shape_cast %47 : vector<1x128x128xbf16> to vector<128x128xbf16>
    %cst_31 = arith.constant dense<0.000000e+00> : vector<128x128xf32>
    %49 = tpu.matmul %46, %48, %cst_31 {dimension_numbers = #tpu.dot_dimension_numbers<[1], [0], [0], [1], [0, 0, 1, 1], [], []>} : vector<128x128xbf16>, vector<128x128xbf16>, vector<128x128xf32> -> vector<128x128xf32>
    %50 = arith.addf %41, %49 : vector<128x128xf32>
    %51 = arith.index_cast %12 : i32 to index
    %c0_32 = arith.constant 0 : index
    %c1_33 = arith.constant 1 : index
    %c1_34 = arith.constant 1 : index
    %c0_35 = arith.constant 0 : index
    %52 = vector.load %arg6[%51, %c0_32, %c1_33, %c1_34, %c0_35] : memref<2x2x10x10x128xf32, #tpu.memory_space<vmem>>, vector<1x2x8x8x128xf32>
    %53 = vector.shape_cast %52 : vector<1x2x8x8x128xf32> to vector<2x8x8x128xf32>
    %54 = vector.shape_cast %53 : vector<2x8x8x128xf32> to vector<128x128xf32>
    %55 = arith.truncf %54 : vector<128x128xf32> to vector<128x128xbf16>
    %c0_36 = arith.constant 0 : index
    %c512 = arith.constant 512 : index
    %c0_37 = arith.constant 0 : index
    %56 = vector.load %arg2[%c0_36, %c512, %c0_37] : memref<1x1152x128xbf16, #tpu.memory_space<vmem>>, vector<1x128x128xbf16>
    %57 = vector.shape_cast %56 : vector<1x128x128xbf16> to vector<128x128xbf16>
    %cst_38 = arith.constant dense<0.000000e+00> : vector<128x128xf32>
    %58 = tpu.matmul %55, %57, %cst_38 {dimension_numbers = #tpu.dot_dimension_numbers<[1], [0], [0], [1], [0, 0, 1, 1], [], []>} : vector<128x128xbf16>, vector<128x128xbf16>, vector<128x128xf32> -> vector<128x128xf32>
    %59 = arith.addf %50, %58 : vector<128x128xf32>
    %60 = arith.index_cast %12 : i32 to index
    %c0_39 = arith.constant 0 : index
    %c1_40 = arith.constant 1 : index
    %c2_41 = arith.constant 2 : index
    %c0_42 = arith.constant 0 : index
    %61 = vector.load %arg6[%60, %c0_39, %c1_40, %c2_41, %c0_42] : memref<2x2x10x10x128xf32, #tpu.memory_space<vmem>>, vector<1x2x8x8x128xf32>
    %62 = vector.shape_cast %61 : vector<1x2x8x8x128xf32> to vector<2x8x8x128xf32>
    %63 = vector.shape_cast %62 : vector<2x8x8x128xf32> to vector<128x128xf32>
    %64 = arith.truncf %63 : vector<128x128xf32> to vector<128x128xbf16>
    %c0_43 = arith.constant 0 : index
    %c640 = arith.constant 640 : index
    %c0_44 = arith.constant 0 : index
    %65 = vector.load %arg2[%c0_43, %c640, %c0_44] : memref<1x1152x128xbf16, #tpu.memory_space<vmem>>, vector<1x128x128xbf16>
    %66 = vector.shape_cast %65 : vector<1x128x128xbf16> to vector<128x128xbf16>
    %cst_45 = arith.constant dense<0.000000e+00> : vector<128x128xf32>
    %67 = tpu.matmul %64, %66, %cst_45 {dimension_numbers = #tpu.dot_dimension_numbers<[1], [0], [0], [1], [0, 0, 1, 1], [], []>} : vector<128x128xbf16>, vector<128x128xbf16>, vector<128x128xf32> -> vector<128x128xf32>
    %68 = arith.addf %59, %67 : vector<128x128xf32>
    %69 = arith.index_cast %12 : i32 to index
    %c0_46 = arith.constant 0 : index
    %c2_47 = arith.constant 2 : index
    %c0_48 = arith.constant 0 : index
    %c0_49 = arith.constant 0 : index
    %70 = vector.load %arg6[%69, %c0_46, %c2_47, %c0_48, %c0_49] : memref<2x2x10x10x128xf32, #tpu.memory_space<vmem>>, vector<1x2x8x8x128xf32>
    %71 = vector.shape_cast %70 : vector<1x2x8x8x128xf32> to vector<2x8x8x128xf32>
    %72 = vector.shape_cast %71 : vector<2x8x8x128xf32> to vector<128x128xf32>
    %73 = arith.truncf %72 : vector<128x128xf32> to vector<128x128xbf16>
    %c0_50 = arith.constant 0 : index
    %c768 = arith.constant 768 : index
    %c0_51 = arith.constant 0 : index
    %74 = vector.load %arg2[%c0_50, %c768, %c0_51] : memref<1x1152x128xbf16, #tpu.memory_space<vmem>>, vector<1x128x128xbf16>
    %75 = vector.shape_cast %74 : vector<1x128x128xbf16> to vector<128x128xbf16>
    %cst_52 = arith.constant dense<0.000000e+00> : vector<128x128xf32>
    %76 = tpu.matmul %73, %75, %cst_52 {dimension_numbers = #tpu.dot_dimension_numbers<[1], [0], [0], [1], [0, 0, 1, 1], [], []>} : vector<128x128xbf16>, vector<128x128xbf16>, vector<128x128xf32> -> vector<128x128xf32>
    %77 = arith.addf %68, %76 : vector<128x128xf32>
    %78 = arith.index_cast %12 : i32 to index
    %c0_53 = arith.constant 0 : index
    %c2_54 = arith.constant 2 : index
    %c1_55 = arith.constant 1 : index
    %c0_56 = arith.constant 0 : index
    %79 = vector.load %arg6[%78, %c0_53, %c2_54, %c1_55, %c0_56] : memref<2x2x10x10x128xf32, #tpu.memory_space<vmem>>, vector<1x2x8x8x128xf32>
    %80 = vector.shape_cast %79 : vector<1x2x8x8x128xf32> to vector<2x8x8x128xf32>
    %81 = vector.shape_cast %80 : vector<2x8x8x128xf32> to vector<128x128xf32>
    %82 = arith.truncf %81 : vector<128x128xf32> to vector<128x128xbf16>
    %c0_57 = arith.constant 0 : index
    %c896 = arith.constant 896 : index
    %c0_58 = arith.constant 0 : index
    %83 = vector.load %arg2[%c0_57, %c896, %c0_58] : memref<1x1152x128xbf16, #tpu.memory_space<vmem>>, vector<1x128x128xbf16>
    %84 = vector.shape_cast %83 : vector<1x128x128xbf16> to vector<128x128xbf16>
    %cst_59 = arith.constant dense<0.000000e+00> : vector<128x128xf32>
    %85 = tpu.matmul %82, %84, %cst_59 {dimension_numbers = #tpu.dot_dimension_numbers<[1], [0], [0], [1], [0, 0, 1, 1], [], []>} : vector<128x128xbf16>, vector<128x128xbf16>, vector<128x128xf32> -> vector<128x128xf32>
    %86 = arith.addf %77, %85 : vector<128x128xf32>
    %87 = arith.index_cast %12 : i32 to index
    %c0_60 = arith.constant 0 : index
    %c2_61 = arith.constant 2 : index
    %c2_62 = arith.constant 2 : index
    %c0_63 = arith.constant 0 : index
    %88 = vector.load %arg6[%87, %c0_60, %c2_61, %c2_62, %c0_63] : memref<2x2x10x10x128xf32, #tpu.memory_space<vmem>>, vector<1x2x8x8x128xf32>
    %89 = vector.shape_cast %88 : vector<1x2x8x8x128xf32> to vector<2x8x8x128xf32>
    %90 = vector.shape_cast %89 : vector<2x8x8x128xf32> to vector<128x128xf32>
    %91 = arith.truncf %90 : vector<128x128xf32> to vector<128x128xbf16>
    %c0_64 = arith.constant 0 : index
    %c1024 = arith.constant 1024 : index
    %c0_65 = arith.constant 0 : index
    %92 = vector.load %arg2[%c0_64, %c1024, %c0_65] : memref<1x1152x128xbf16, #tpu.memory_space<vmem>>, vector<1x128x128xbf16>
    %93 = vector.shape_cast %92 : vector<1x128x128xbf16> to vector<128x128xbf16>
    %cst_66 = arith.constant dense<0.000000e+00> : vector<128x128xf32>
    %94 = tpu.matmul %91, %93, %cst_66 {dimension_numbers = #tpu.dot_dimension_numbers<[1], [0], [0], [1], [0, 0, 1, 1], [], []>} : vector<128x128xbf16>, vector<128x128xbf16>, vector<128x128xf32> -> vector<128x128xf32>
    %95 = arith.addf %86, %94 : vector<128x128xf32>
    %cst_67 = arith.constant dense<0.000000e+00> : vector<128xf32>
    %96 = vector.multi_reduction <add>, %95, %cst_67 [0] : vector<128x128xf32> to vector<128xf32>
    %97 = vector.shape_cast %96 : vector<128xf32> to vector<1x128xf32>
    %98 = arith.mulf %95, %95 : vector<128x128xf32>
    %cst_68 = arith.constant dense<0.000000e+00> : vector<128xf32>
    %99 = vector.multi_reduction <add>, %98, %cst_68 [0] : vector<128x128xf32> to vector<128xf32>
    %100 = vector.shape_cast %99 : vector<128xf32> to vector<1x128xf32>
    %cst_69 = arith.constant 7.812500e-03 : f32
    %101 = vector.broadcast %cst_69 : f32 to vector<1x128xf32>
    %102 = arith.mulf %97, %101 : vector<1x128xf32>
    %cst_70 = arith.constant 7.812500e-03 : f32
    %103 = vector.broadcast %cst_70 : f32 to vector<1x128xf32>
    %104 = arith.mulf %100, %103 : vector<1x128xf32>
    %105 = arith.mulf %102, %102 : vector<1x128xf32>
    %106 = arith.subf %104, %105 : vector<1x128xf32>
    %c0_71 = arith.constant 0 : index
    %c0_72 = arith.constant 0 : index
    %c0_73 = arith.constant 0 : index
    %107 = vector.load %arg3[%c0_71, %c0_72, %c0_73] : memref<1x1x128xf32, #tpu.memory_space<vmem>>, vector<1x1x128xf32>
    %108 = vector.shape_cast %107 : vector<1x1x128xf32> to vector<1x128xf32>
    %cst_74 = arith.constant 9.99999974E-6 : f32
    %109 = vector.broadcast %cst_74 : f32 to vector<1x128xf32>
    %110 = arith.addf %106, %109 : vector<1x128xf32>
    %111 = math.rsqrt %110 : vector<1x128xf32>
    %112 = arith.mulf %108, %111 : vector<1x128xf32>
    %c0_75 = arith.constant 0 : index
    %c0_76 = arith.constant 0 : index
    %c0_77 = arith.constant 0 : index
    %113 = vector.load %arg4[%c0_75, %c0_76, %c0_77] : memref<1x1x128xf32, #tpu.memory_space<vmem>>, vector<1x1x128xf32>
    %114 = vector.shape_cast %113 : vector<1x1x128xf32> to vector<1x128xf32>
    %115 = arith.mulf %102, %112 : vector<1x128xf32>
    %116 = arith.subf %114, %115 : vector<1x128xf32>
    %117 = vector.broadcast %112 : vector<1x128xf32> to vector<128x128xf32>
    %118 = arith.mulf %95, %117 : vector<128x128xf32>
    %119 = vector.broadcast %116 : vector<1x128xf32> to vector<128x128xf32>
    %120 = arith.addf %118, %119 : vector<128x128xf32>
    %c2_i32_78 = arith.constant 2 : i32
    %121 = arith.cmpi sge, %arg0, %c2_i32_78 : i32
    %c2_i32_79 = arith.constant 2 : i32
    %c0_i32_80 = arith.constant 0 : i32
    %122 = arith.cmpi eq, %c2_i32_79, %c0_i32_80 : i32
    %c1_i32_81 = arith.constant 1 : i32
    %123 = arith.select %122, %c1_i32_81, %c2_i32_79 : i32
    %124 = arith.remsi %arg0, %123 : i32
    %c0_i32_82 = arith.constant 0 : i32
    %125 = arith.cmpi ne, %124, %c0_i32_82 : i32
    %c0_i32_83 = arith.constant 0 : i32
    %126 = arith.cmpi slt, %124, %c0_i32_83 : i32
    %c0_i32_84 = arith.constant 0 : i32
    %127 = arith.cmpi slt, %123, %c0_i32_84 : i32
    %128 = arith.xori %126, %127 : i1
    %129 = arith.andi %128, %125 : i1
    %130 = arith.addi %124, %123 : i32
    %131 = arith.select %129, %130, %124 : i32
    %c0_i32_85 = arith.constant 0 : i32
    %132 = arith.cmpi eq, %131, %c0_i32_85 : i32
    %133 = arith.andi %121, %132 : i1
    %134 = arith.extui %133 : i1 to i32
    %135 = arith.sitofp %134 : i32 to f32
    %136 = arith.index_cast %13 : i32 to index
    %c0_86 = arith.constant 0 : index
    %c1_87 = arith.constant 1 : index
    %c1_88 = arith.constant 1 : index
    %c0_89 = arith.constant 0 : index
    %137 = vector.load %arg6[%136, %c0_86, %c1_87, %c1_88, %c0_89] : memref<2x2x10x10x128xf32, #tpu.memory_space<vmem>>, vector<1x2x8x8x128xf32>
    %138 = vector.shape_cast %137 : vector<1x2x8x8x128xf32> to vector<2x8x8x128xf32>
    %139 = vector.shape_cast %138 : vector<2x8x8x128xf32> to vector<128x128xf32>
    %140 = vector.broadcast %135 : f32 to vector<128x128xf32>
    %141 = arith.mulf %139, %140 : vector<128x128xf32>
    %142 = arith.addf %120, %141 : vector<128x128xf32>
    %cst_90 = arith.constant 0.000000e+00 : f32
    %143 = vector.broadcast %cst_90 : f32 to vector<128x128xf32>
    %144 = arith.maximumf %142, %143 : vector<128x128xf32>
    %145 = vector.shape_cast %144 : vector<128x128xf32> to vector<2x8x8x128xf32>
    %146 = arith.index_cast %13 : i32 to index
    %c0_91 = arith.constant 0 : index
    %c1_92 = arith.constant 1 : index
    %c1_93 = arith.constant 1 : index
    %c0_94 = arith.constant 0 : index
    %147 = vector.load %arg6[%146, %c0_91, %c1_92, %c1_93, %c0_94] : memref<2x2x10x10x128xf32, #tpu.memory_space<vmem>>, vector<1x2x8x8x128xf32>
    %148 = vector.shape_cast %147 : vector<1x2x8x8x128xf32> to vector<2x8x8x128xf32>
    %149 = vector.shape_cast %145 : vector<2x8x8x128xf32> to vector<1x2x8x8x128xf32>
    tpu.vector_store %arg6[%146, %c0_91, %c1_92, %c1_93, %c0_94], %149 {strides = array<i32>} : memref<2x2x10x10x128xf32, #tpu.memory_space<vmem>>, vector<1x2x8x8x128xf32>,
    %c6_i32 = arith.constant 6 : i32
    %150 = arith.cmpi eq, %arg0, %c6_i32 : i32
    %151 = arith.extui %150 : i1 to i32
    %c0_i32_95 = arith.constant 0 : i32
    %152 = arith.cmpi ne, %151, %c0_i32_95 : i32
    scf.if %152 {
      %c0_96 = arith.constant 0 : index
      %c0_97 = arith.constant 0 : index
      %c0_98 = arith.constant 0 : index
      %c0_99 = arith.constant 0 : index
      %153 = vector.load %arg5[%c0_96, %c0_97, %c0_98, %c0_99] : memref<2x8x8x128xf32, #tpu.memory_space<vmem>>, vector<2x8x8x128xf32>
      tpu.vector_store %arg5[%c0_96, %c0_97, %c0_98, %c0_99], %145 {strides = array<i32>} : memref<2x8x8x128xf32, #tpu.memory_space<vmem>>, vector<2x8x8x128xf32>,
    } else {
    }
    return
  }
  func.func @transform_0(%arg0: i32) -> (i32, i32, i32, i32) {
    %c0_i32 = arith.constant 0 : i32
    %c0_i32_0 = arith.constant 0 : i32
    %c0_i32_1 = arith.constant 0 : i32
    %c0_i32_2 = arith.constant 0 : i32
    %c0_i32_3 = arith.constant 0 : i32
    return %c0_i32, %c0_i32_0, %c0_i32_1, %c0_i32_2 : i32, i32, i32, i32
  }
  func.func @transform_1(%arg0: i32) -> (i32, i32, i32) {
    %c0_i32 = arith.constant 0 : i32
    %c0_i32_0 = arith.constant 0 : i32
    %c0_i32_1 = arith.constant 0 : i32
    return %arg0, %c0_i32, %c0_i32_0 : i32, i32, i32
  }
  func.func @transform_2(%arg0: i32) -> (i32, i32, i32) {
    %c0_i32 = arith.constant 0 : i32
    %c0_i32_0 = arith.constant 0 : i32
    %c0_i32_1 = arith.constant 0 : i32
    return %arg0, %c0_i32, %c0_i32_0 : i32, i32, i32
  }
  func.func @transform_3(%arg0: i32) -> (i32, i32, i32) {
    %c0_i32 = arith.constant 0 : i32
    %c0_i32_0 = arith.constant 0 : i32
    %c0_i32_1 = arith.constant 0 : i32
    return %arg0, %c0_i32, %c0_i32_0 : i32, i32, i32
  }
  func.func @transform_4(%arg0: i32) -> (i32, i32, i32, i32) {
    %c0_i32 = arith.constant 0 : i32
    %c0_i32_0 = arith.constant 0 : i32
    %c0_i32_1 = arith.constant 0 : i32
    %c0_i32_2 = arith.constant 0 : i32
    %c0_i32_3 = arith.constant 0 : i32
    return %c0_i32, %c0_i32_0, %c0_i32_1, %c0_i32_2 : i32, i32, i32, i32
  }
}

</mosaic_0001>

<llo_original>
// kernel: backbone_forward.1
$region0: #{backbone_forward.1}
  #allocation0 [shape = 'u32[]', space=smem, size = 0x4, offset = 0x4, fixed_abs, tag = 'smem constant byte address 0x4 - core index']
  #allocation1 [shape = 'u32[144,128]{1,0:T(1,128)}', space=vmem, size = 0x12000, scoped, tag = 'internal scratch']
  #allocation2 [shape = 'f32[2,2,10,10,128]{4,3,2,1,0:T(8,128)}', space=vmem, size = 0x50000, scoped, tag = 'scratch operand']
  %s0 = inlined_call_operand.vmem [shape: f32[2,8,8,128], index: 0, kind: input, shape index: {}]
  %s1 = inlined_call_operand.vmem [shape: bf16[7,1152,128], index: 1, kind: input, shape index: {}]
  %s2 = inlined_call_operand.vmem [shape: f32[7,1,128], index: 2, kind: input, shape index: {}]
  %s3 = inlined_call_operand.vmem [shape: f32[7,1,128], index: 3, kind: input, shape index: {}]
  %s4 = inlined_call_operand.hbm [shape: f32[2,8,8,128], index: 4, kind: output, shape index: {}]
  %s5 = sld [smem:[#allocation0]]
  $region57: #{backbone_forward.1} parent=0
    _
  %s7 = ssub.s32 1, %s5
  %s8 = scalar_select 0, %s7, %s5
  $region1: #{backbone_forward.1} parent=0
    #allocation3 [shape = 'u8[65536]{0}', space=vmem, size = 0x10000, scoped, tag = 'output window, operand 0, single buffered']
    #allocation4 [shape = 's32[2]{0}', space=sflag, size = 0x8, scoped, tag = 'scoped memory for backbone_forward.1']
    %9 = vsyncpa [#allocation4], 0
    loop: start=0, step=1, limit=9
    $region2: #{backbone_forward.1} parent=1 // loop_pre_header
      _
    $region3: #{backbone_forward.1} parent=1 // loop_header
      %s11 = sphi 0, %s15
      %p12 = scmp.ge.s32.totalorder %s11, 9
      %s19 = sphi 0, %s19
      %s21 = sphi 0, %s19
      %s22 = sphi 0, %s21
      %s36 = sphi 0, %s22
      %s42 = sphi 0, %s44
      %s45 = sphi 0, %s42
      %s46 = sphi 0, %s45
      %s62 = sphi 0, %s46
      %s68 = sphi 0, %s70
      %s71 = sphi 0, %s68
      %s72 = sphi 0, %s71
      %s88 = sphi 0, %s72
      %s94 = sphi 0, %s96
      %s97 = sphi 0, %s94
      %s98 = sphi 0, %s97
      %s114 = sphi 0, %s98
      %s118 = sphi 0, %s118
      %s120 = sphi 0, %s118
      %s121 = sphi 0, %s120
      %s135 = sphi 0, %s121
    $region4: #{backbone_forward.1} parent=1 // loop_header_branch
      %14 = sbr.rel (%p12) target = $region8
    $region5: #{backbone_forward.1} parent=1 // loop_body
      %s16 = ssub.s32 %s11, 1
      %s17 = ssub.s32 %s11, 2
      %s18 = sadd.s32 %s11, 1
      %s20 = sadd.s32 %s19, 1
      %p23 = scmp.eq.s32.totalorder %s11, 6
      %p24 = scmp.ne.s32.totalorder %s19, %s21
      %p25 = scmp.eq.s32.totalorder %s11, 0
      %p26 = por %p24, %p25
      %p27 = scmp.ne.s32.totalorder %s19, %s21
      %p28 = scmp.eq.s32.totalorder %s16, 6
      %p29 = por %p27, %p28
      %p30 = scmp.ne.s32.totalorder %s21, %s22
      %p31 = scmp.eq.s32.totalorder %s16, 0
      %p32 = por %p30, %p31
      %p33 = scmp.ne.s32.totalorder %s21, %s22
      %p34 = scmp.eq.s32.totalorder %s17, 6
      %p35 = por %p33, %p34
      %p37 = scmp.ne.s32.totalorder %s22, %s36
      %p38 = scmp.eq.s32.totalorder %s17, 0
      %p39 = por %p37, %p38
      %s40 = ssub.s32 %s11, %s18
      %p41 = scmp.eq.s32.totalorder %s40, 0
      %s43 = sadd.s32 %s42, 1
      %s44 = scalar_select %p41, %s42, %s43
      %p47 = pneg %p41
      %p48 = scmp.eq.s32.totalorder %s11, 6
      %p49 = por %p47, %p48
      %p50 = scmp.ne.s32.totalorder %s42, %s45
      %p51 = scmp.eq.s32.totalorder %s11, 0
      %p52 = por %p50, %p51
      %p53 = scmp.ne.s32.totalorder %s42, %s45
      %p54 = scmp.eq.s32.totalorder %s16, 6
      %p55 = por %p53, %p54
      %p56 = scmp.ne.s32.totalorder %s45, %s46
      %p57 = scmp.eq.s32.totalorder %s16, 0
      %p58 = por %p56, %p57
      %p59 = scmp.ne.s32.totalorder %s45, %s46
      %p60 = scmp.eq.s32.totalorder %s17, 6
      %p61 = por %p59, %p60
      %p63 = scmp.ne.s32.totalorder %s46, %s62
      %p64 = scmp.eq.s32.totalorder %s17, 0
      %p65 = por %p63, %p64
      %s66 = ssub.s32 %s11, %s18
      %p67 = scmp.eq.s32.totalorder %s66, 0
      %s69 = sadd.s32 %s68, 1
      %s70 = scalar_select %p67, %s68, %s69
      %p73 = pneg %p67
      %p74 = scmp.eq.s32.totalorder %s11, 6
      %p75 = por %p73, %p74
      %p76 = scmp.ne.s32.totalorder %s68, %s71
      %p77 = scmp.eq.s32.totalorder %s11, 0
      %p78 = por %p76, %p77
      %p79 = scmp.ne.s32.totalorder %s68, %s71
      %p80 = scmp.eq.s32.totalorder %s16, 6
      %p81 = por %p79, %p80
      %p82 = scmp.ne.s32.totalorder %s71, %s72
      %p83 = scmp.eq.s32.totalorder %s16, 0
      %p84 = por %p82, %p83
      %p85 = scmp.ne.s32.totalorder %s71, %s72
      %p86 = scmp.eq.s32.totalorder %s17, 6
      %p87 = por %p85, %p86
      %p89 = scmp.ne.s32.totalorder %s72, %s88
      %p90 = scmp.eq.s32.totalorder %s17, 0
      %p91 = por %p89, %p90
      %s92 = ssub.s32 %s11, %s18
      %p93 = scmp.eq.s32.totalorder %s92, 0
      %s95 = sadd.s32 %s94, 1
      %s96 = scalar_select %p93, %s94, %s95
      %p99 = pneg %p93
      %p100 = scmp.eq.s32.totalorder %s11, 6
      %p101 = por %p99, %p100
      %p102 = scmp.ne.s32.totalorder %s94, %s97
      %p103 = scmp.eq.s32.totalorder %s11, 0
      %p104 = por %p102, %p103
      %p105 = scmp.ne.s32.totalorder %s94, %s97
      %p106 = scmp.eq.s32.totalorder %s16, 6
      %p107 = por %p105, %p106
      %p108 = scmp.ne.s32.totalorder %s97, %s98
      %p109 = scmp.eq.s32.totalorder %s16, 0
      %p110 = por %p108, %p109
      %p111 = scmp.ne.s32.totalorder %s97, %s98
      %p112 = scmp.eq.s32.totalorder %s17, 6
      %p113 = por %p111, %p112
      %p115 = scmp.ne.s32.totalorder %s98, %s114
      %p116 = scmp.eq.s32.totalorder %s17, 0
      %p117 = por %p115, %p116
      %s119 = sadd.s32 %s118, 1
      %p122 = scmp.eq.s32.totalorder %s11, 6
      %p123 = scmp.ne.s32.totalorder %s118, %s120
      %p124 = scmp.eq.s32.totalorder %s11, 0
      %p125 = por %p123, %p124
      %p126 = scmp.ne.s32.totalorder %s118, %s120
      %p127 = scmp.eq.s32.totalorder %s16, 6
      %p128 = por %p126, %p127
      %p129 = scmp.ne.s32.totalorder %s120, %s121
      %p130 = scmp.eq.s32.totalorder %s16, 0
      %p131 = por %p129, %p130
      %p132 = scmp.ne.s32.totalorder %s120, %s121
      %p133 = scmp.eq.s32.totalorder %s17, 6
      %p134 = por %p132, %p133
      %p136 = scmp.ne.s32.totalorder %s121, %s135
      %p137 = scmp.eq.s32.totalorder %s17, 0
      %p138 = por %p136, %p137
      %p139 = scmp.le.s32.totalorder 1, %s11
      %p140 = scmp.lt.s32.totalorder %s11, 8
      %p141 = pnand %p139, %p140
      %p142 = pneg %p141
      // Predicated region
      $region9: #{backbone_forward.1} parent=5 // pred_check
        _
      $region10: #{backbone_forward.1} parent=5 // pred_check_branch
        %144 = sbr.rel (%p141) target = $region12
      $region11: #{backbone_forward.1} parent=5 // pred_region
        %s145 = ssub.s32 %s11, 1
        // Predicated region
        $region13: #{backbone_forward.1} parent=11 // pred_check
          %p146 = pneg %p32
        $region14: #{backbone_forward.1} parent=11 // pred_check_branch
          %148 = sbr.rel (%p146) target = $region16
        $region15: #{backbone_forward.1} parent=11 // pred_region
          _
        $region16: #{backbone_forward.1} parent=11 // pred_fallthru
          _
      $region12: #{backbone_forward.1} parent=5 // pred_fallthru
        _
      %p149 = scmp.lt.s32.totalorder %s11, 7
      // Predicated region
      $region17: #{backbone_forward.1} parent=5 // pred_check
        %p150 = pneg %p149
      $region18: #{backbone_forward.1} parent=5 // pred_check_branch
        %152 = sbr.rel (%p150) target = $region20
      $region19: #{backbone_forward.1} parent=5 // pred_region
        // Predicated region
        $region21: #{backbone_forward.1} parent=19 // pred_check
          %p153 = pneg %p52
        $region22: #{backbone_forward.1} parent=19 // pred_check_branch
          %155 = sbr.rel (%p153) target = $region24
        $region23: #{backbone_forward.1} parent=19 // pred_region
          %p156 = scmp.lt.s32.totalorder %s11, 6
          %s157 = scalar_select %p156, %s11, 6
          %s158 = smul.addr %s157, 144
          %s159 = smul.addr %s158, 4
          %s160 = scalar_lea.vmem %s1, %s159
        $region24: #{backbone_forward.1} parent=19 // pred_fallthru
          _
        // Predicated region
        $region25: #{backbone_forward.1} parent=19 // pred_check
          %p161 = pneg %p78
        $region26: #{backbone_forward.1} parent=19 // pred_check_branch
          %163 = sbr.rel (%p161) target = $region28
        $region27: #{backbone_forward.1} parent=19 // pred_region
          %p164 = scmp.lt.s32.totalorder %s11, 6
          %s165 = scalar_select %p164, %s11, 6
          %s166 = scalar_lea.vmem %s2, %s165
        $region28: #{backbone_forward.1} parent=19 // pred_fallthru
          _
        // Predicated region
        $region29: #{backbone_forward.1} parent=19 // pred_check
          %p167 = pneg %p104
        $region30: #{backbone_forward.1} parent=19 // pred_check_branch
          %169 = sbr.rel (%p167) target = $region32
        $region31: #{backbone_forward.1} parent=19 // pred_region
          %p170 = scmp.lt.s32.totalorder %s11, 6
          %s171 = scalar_select %p170, %s11, 6
          %s172 = scalar_lea.vmem %s3, %s171
        $region32: #{backbone_forward.1} parent=19 // pred_fallthru
          _
      $region20: #{backbone_forward.1} parent=5 // pred_fallthru
        _
      %p173 = scmp.le.s32.totalorder 1, %s11
      %p174 = scmp.lt.s32.totalorder %s11, 8
      %p175 = pnand %p173, %p174
      %p176 = pneg %p175
      // Predicated region
      $region33: #{backbone_forward.1} parent=5 // pred_check
        _
      $region34: #{backbone_forward.1} parent=5 // pred_check_branch
        %178 = sbr.rel (%p175) target = $region36
      $region35: #{backbone_forward.1} parent=5 // pred_region
        %s179 = ssub.s32 %s11, 1
        %p180 = pneg %p32
        %p181 = pneg %p29
        %p182 = scmp.lt.s32.totalorder %s16, 6
        %s183 = scalar_select %p182, %s16, 6
        %s184 = smul.addr %s183, 144
        %s185 = smul.addr %s184, 4
        %s186 = scalar_lea.vmem %s1, %s185
        %p187 = pneg %p58
        %p188 = pneg %p55
        %p189 = scmp.lt.s32.totalorder %s16, 6
        %s190 = scalar_select %p189, %s16, 6
        %s191 = scalar_lea.vmem %s2, %s190
        %p192 = pneg %p84
        %p193 = pneg %p81
        %p194 = scmp.lt.s32.totalorder %s16, 6
        %s195 = scalar_select %p194, %s16, 6
        %s196 = scalar_lea.vmem %s3, %s195
        %p197 = pneg %p110
        %p198 = pneg %p107
        %p199 = pneg %p131
        %p200 = pneg %p128
        %p201 = scmp.lt.s32.totalorder %s16, 6
        %s202 = scalar_select %p201, %s16, 6
        %s203 = smul.addr %s202, 144
        %s204 = smul.addr %s203, 4
        %s205 = scalar_lea.vmem %s1, %s204
        %p206 = scmp.lt.s32.totalorder %s16, 6
        %s207 = scalar_select %p206, %s16, 6
        %s208 = scalar_lea.vmem %s2, %s207
        %p209 = scmp.lt.s32.totalorder %s16, 6
        %s210 = scalar_select %p209, %s16, 6
        %s211 = scalar_lea.vmem %s3, %s210
        %p213 = scmp.eq.s32.totalorder %s16, 0
        // Predicated region
        $region37: #{backbone_forward.1} parent=35 // pred_check
          %p214 = pneg %p213
        $region38: #{backbone_forward.1} parent=35 // pred_check_branch
          %216 = sbr.rel (%p214) target = $region40
        $region39: #{backbone_forward.1} parent=35 // pred_region
          %217 = vst [vmem:[#allocation2] sm:$0xff] 0.0
          %218 = vst [vmem:[#allocation2 + $0x8] sm:$0x3] 0.0
          %219 = vst [vmem:[#allocation2 + $0x10] sm:$0xff] 0.0
          %220 = vst [vmem:[#allocation2 + $0x18] sm:$0x3] 0.0
          %221 = vst [vmem:[#allocation2 + $0x20] sm:$0xff] 0.0
          %222 = vst [vmem:[#allocation2 + $0x28] sm:$0x3] 0.0
          %223 = vst [vmem:[#allocation2 + $0x30] sm:$0xff] 0.0
          %224 = vst [vmem:[#allocation2 + $0x38] sm:$0x3] 0.0
          %225 = vst [vmem:[#allocation2 + $0x40] sm:$0xff] 0.0
          %226 = vst [vmem:[#allocation2 + $0x48] sm:$0x3] 0.0
          %227 = vst [vmem:[#allocation2 + $0x50] sm:$0xff] 0.0
          %228 = vst [vmem:[#allocation2 + $0x58] sm:$0x3] 0.0
          %229 = vst [vmem:[#allocation2 + $0x60] sm:$0xff] 0.0
          %230 = vst [vmem:[#allocation2 + $0x68] sm:$0x3] 0.0
          %231 = vst [vmem:[#allocation2 + $0x70] sm:$0xff] 0.0
          %232 = vst [vmem:[#allocation2 + $0x78] sm:$0x3] 0.0
          %233 = vst [vmem:[#allocation2 + $0x80] sm:$0xff] 0.0
          %234 = vst [vmem:[#allocation2 + $0x88] sm:$0x3] 0.0
          %235 = vst [vmem:[#allocation2 + $0x90] sm:$0xff] 0.0
          %236 = vst [vmem:[#allocation2 + $0x98] sm:$0x3] 0.0
          %237 = vst [vmem:[#allocation2 + $0xa0] sm:$0xff] 0.0
          %238 = vst [vmem:[#allocation2 + $0xa8] sm:$0x3] 0.0
          %239 = vst [vmem:[#allocation2 + $0xb0] sm:$0xff] 0.0
          %240 = vst [vmem:[#allocation2 + $0xb8] sm:$0x3] 0.0
          %241 = vst [vmem:[#allocation2 + $0xc0] sm:$0xff] 0.0
          %242 = vst [vmem:[#allocation2 + $0xc8] sm:$0x3] 0.0
          %243 = vst [vmem:[#allocation2 + $0xd0] sm:$0xff] 0.0
          %244 = vst [vmem:[#allocation2 + $0xd8] sm:$0x3] 0.0
          %245 = vst [vmem:[#allocation2 + $0xe0] sm:$0xff] 0.0
          %246 = vst [vmem:[#allocation2 + $0xe8] sm:$0x3] 0.0
          %247 = vst [vmem:[#allocation2 + $0xf0] sm:$0xff] 0.0
          %248 = vst [vmem:[#allocation2 + $0xf8] sm:$0x3] 0.0
          %249 = vst [vmem:[#allocation2 + $0x100] sm:$0xff] 0.0
          %250 = vst [vmem:[#allocation2 + $0x108] sm:$0x3] 0.0
          %251 = vst [vmem:[#allocation2 + $0x110] sm:$0xff] 0.0
          %252 = vst [vmem:[#allocation2 + $0x118] sm:$0x3] 0.0
          %253 = vst [vmem:[#allocation2 + $0x120] sm:$0xff] 0.0
          %254 = vst [vmem:[#allocation2 + $0x128] sm:$0x3] 0.0
          %255 = vst [vmem:[#allocation2 + $0x130] sm:$0xff] 0.0
          %256 = vst [vmem:[#allocation2 + $0x138] sm:$0x3] 0.0
          %257 = vst [vmem:[#allocation2 + $0x140] sm:$0xff] 0.0
          %258 = vst [vmem:[#allocation2 + $0x148] sm:$0x3] 0.0
          %259 = vst [vmem:[#allocation2 + $0x150] sm:$0xff] 0.0
          %260 = vst [vmem:[#allocation2 + $0x158] sm:$0x3] 0.0
          %261 = vst [vmem:[#allocation2 + $0x160] sm:$0xff] 0.0
          %262 = vst [vmem:[#allocation2 + $0x168] sm:$0x3] 0.0
          %263 = vst [vmem:[#allocation2 + $0x170] sm:$0xff] 0.0
          %264 = vst [vmem:[#allocation2 + $0x178] sm:$0x3] 0.0
          %265 = vst [vmem:[#allocation2 + $0x180] sm:$0xff] 0.0
          %266 = vst [vmem:[#allocation2 + $0x188] sm:$0x3] 0.0
          %267 = vst [vmem:[#allocation2 + $0x190] sm:$0xff] 0.0
          %268 = vst [vmem:[#allocation2 + $0x198] sm:$0x3] 0.0
          %269 = vst [vmem:[#allocation2 + $0x1a0] sm:$0xff] 0.0
          %270 = vst [vmem:[#allocation2 + $0x1a8] sm:$0x3] 0.0
          %271 = vst [vmem:[#allocation2 + $0x1b0] sm:$0xff] 0.0
          %272 = vst [vmem:[#allocation2 + $0x1b8] sm:$0x3] 0.0
          %273 = vst [vmem:[#allocation2 + $0x1c0] sm:$0xff] 0.0
          %274 = vst [vmem:[#allocation2 + $0x1c8] sm:$0x3] 0.0
          %275 = vst [vmem:[#allocation2 + $0x1d0] sm:$0xff] 0.0
          %276 = vst [vmem:[#allocation2 + $0x1d8] sm:$0x3] 0.0
          %277 = vst [vmem:[#allocation2 + $0x1e0] sm:$0xff] 0.0
          %278 = vst [vmem:[#allocation2 + $0x1e8] sm:$0x3] 0.0
          %279 = vst [vmem:[#allocation2 + $0x1f0] sm:$0xff] 0.0
          %280 = vst [vmem:[#allocation2 + $0x1f8] sm:$0x3] 0.0
          %281 = vst [vmem:[#allocation2 + $0x200] sm:$0xff] 0.0
          %282 = vst [vmem:[#allocation2 + $0x208] sm:$0x3] 0.0
          %283 = vst [vmem:[#allocation2 + $0x210] sm:$0xff] 0.0
          %284 = vst [vmem:[#allocation2 + $0x218] sm:$0x3] 0.0
          %285 = vst [vmem:[#allocation2 + $0x220] sm:$0xff] 0.0
          %286 = vst [vmem:[#allocation2 + $0x228] sm:$0x3] 0.0
          %287 = vst [vmem:[#allocation2 + $0x230] sm:$0xff] 0.0
          %288 = vst [vmem:[#allocation2 + $0x238] sm:$0x3] 0.0
          %289 = vst [vmem:[#allocation2 + $0x240] sm:$0xff] 0.0
          %290 = vst [vmem:[#allocation2 + $0x248] sm:$0x3] 0.0
          %291 = vst [vmem:[#allocation2 + $0x250] sm:$0xff] 0.0
          %292 = vst [vmem:[#allocation2 + $0x258] sm:$0x3] 0.0
          %293 = vst [vmem:[#allocation2 + $0x260] sm:$0xff] 0.0
          %294 = vst [vmem:[#allocation2 + $0x268] sm:$0x3] 0.0
          %295 = vst [vmem:[#allocation2 + $0x270] sm:$0xff] 0.0
          %296 = vst [vmem:[#allocation2 + $0x278] sm:$0x3] 0.0
          %v297 = vld [vmem:[%s0] sm:$0xff]
          %v298 = vld [vmem:[%s0 + $0x8] sm:$0xff]
          %v299 = vld [vmem:[%s0 + $0x10] sm:$0xff]
          %v300 = vld [vmem:[%s0 + $0x18] sm:$0xff]
          %v301 = vld [vmem:[%s0 + $0x20] sm:$0xff]
          %v302 = vld [vmem:[%s0 + $0x28] sm:$0xff]
          %v303 = vld [vmem:[%s0 + $0x30] sm:$0xff]
          %v304 = vld [vmem:[%s0 + $0x38] sm:$0xff]
          %v305 = vld [vmem:[%s0 + $0x40] sm:$0xff]
          %v306 = vld [vmem:[%s0 + $0x48] sm:$0xff]
          %v307 = vld [vmem:[%s0 + $0x50] sm:$0xff]
          %v308 = vld [vmem:[%s0 + $0x58] sm:$0xff]
          %v309 = vld [vmem:[%s0 + $0x60] sm:$0xff]
          %v310 = vld [vmem:[%s0 + $0x68] sm:$0xff]
          %v311 = vld [vmem:[%s0 + $0x70] sm:$0xff]
          %v312 = vld [vmem:[%s0 + $0x78] sm:$0xff]
          %s313 = scalar_lea.vmem [#allocation2], 16
          %314 = vst [vmem:[%s313 + $0x1] sm:$0xff] %v297
          %315 = vst [vmem:[%s313 + $0x11] sm:$0xff] %v298
          %316 = vst [vmem:[%s313 + $0x21] sm:$0xff] %v299
          %317 = vst [vmem:[%s313 + $0x31] sm:$0xff] %v300
          %318 = vst [vmem:[%s313 + $0x41] sm:$0xff] %v301
          %319 = vst [vmem:[%s313 + $0x51] sm:$0xff] %v302
          %320 = vst [vmem:[%s313 + $0x61] sm:$0xff] %v303
          %321 = vst [vmem:[%s313 + $0x71] sm:$0xff] %v304
          %322 = vst [vmem:[%s313 + $0xa1] sm:$0xff] %v305
          %323 = vst [vmem:[%s313 + $0xb1] sm:$0xff] %v306
          %324 = vst [vmem:[%s313 + $0xc1] sm:$0xff] %v307
          %325 = vst [vmem:[%s313 + $0xd1] sm:$0xff] %v308
          %326 = vst [vmem:[%s313 + $0xe1] sm:$0xff] %v309
          %327 = vst [vmem:[%s313 + $0xf1] sm:$0xff] %v310
          %328 = vst [vmem:[%s313 + $0x101] sm:$0xff] %v311
          %329 = vst [vmem:[%s313 + $0x111] sm:$0xff] %v312
        $region40: #{backbone_forward.1} parent=35 // pred_fallthru
          _
        %p330 = scmp.lt.s32.totalorder %s16, 0
        %s331 = ssub.s32 0, %s16
        %s332 = scalar_select %p330, %s331, %s16
        %s333 = sand.u32 %s332, 1
        %s334 = ssub.s32 0, %s333
        %s335 = scalar_select %p330, %s334, %s333
        %p336 = scmp.ne.s32.totalorder %s335, 0
        %p337 = scmp.lt.s32.totalorder %s335, 0
        %p338 = pnand %p337, %p336
        %p339 = pneg %p338
        %s340 = sadd.s32 %s335, 2
        %s341 = scalar_select %p339, %s340, %s335
        %s342 = ssub.s32 1, %s341
        %s343 = smul.u32 %s341, 320
        %s344 = scalar_lea.vmem [#allocation2], %s343
        %v345 = vld [vmem:[%s344] sm:$0xff]
        %v346 = vld [vmem:[%s344 + $0x10] sm:$0xff]
        %v347 = vld [vmem:[%s344 + $0x20] sm:$0xff]
        %v348 = vld [vmem:[%s344 + $0x30] sm:$0xff]
        %v349 = vld [vmem:[%s344 + $0x40] sm:$0xff]
        %v350 = vld [vmem:[%s344 + $0x50] sm:$0xff]
        %v351 = vld [vmem:[%s344 + $0x60] sm:$0xff]
        %v352 = vld [vmem:[%s344 + $0x70] sm:$0xff]
        %v353 = vld [vmem:[%s344 + $0xa0] sm:$0xff]
        %v354 = vld [vmem:[%s344 + $0xb0] sm:$0xff]
        %v355 = vld [vmem:[%s344 + $0xc0] sm:$0xff]
        %v356 = vld [vmem:[%s344 + $0xd0] sm:$0xff]
        %v357 = vld [vmem:[%s344 + $0xe0] sm:$0xff]
        %v358 = vld [vmem:[%s344 + $0xf0] sm:$0xff]
        %v359 = vld [vmem:[%s344 + $0x100] sm:$0xff]
        %v360 = vld [vmem:[%s344 + $0x110] sm:$0xff]
        %v361 = vpack.c.bf16 %v346, %v345
        %v362 = vpack.c.bf16 %v348, %v347
        %v363 = vpack.c.bf16 %v350, %v349
        %v364 = vpack.c.bf16 %v352, %v351
        %v365 = vpack.c.bf16 %v354, %v353
        %v366 = vpack.c.bf16 %v356, %v355
        %v367 = vpack.c.bf16 %v358, %v357
        %v368 = vpack.c.bf16 %v360, %v359
        %v369 = vld [vmem:[%s205] sm:$0xf]
        %v370 = vld [vmem:[%s205 + $0x4] sm:$0xf]
        %v371 = vld [vmem:[%s205 + $0x8] sm:$0xf]
        %v372 = vld [vmem:[%s205 + $0xc] sm:$0xf]
        %v373 = vld [vmem:[%s205 + $0x10] sm:$0xf]
        %v374 = vld [vmem:[%s205 + $0x14] sm:$0xf]
        %v375 = vld [vmem:[%s205 + $0x18] sm:$0xf]
        %v376 = vld [vmem:[%s205 + $0x1c] sm:$0xf]
        %v377 = vld [vmem:[%s205 + $0x20] sm:$0xf]
        %v378 = vld [vmem:[%s205 + $0x24] sm:$0xf]
        %v379 = vld [vmem:[%s205 + $0x28] sm:$0xf]
        %v380 = vld [vmem:[%s205 + $0x2c] sm:$0xf]
        %v381 = vld [vmem:[%s205 + $0x30] sm:$0xf]
        %v382 = vld [vmem:[%s205 + $0x34] sm:$0xf]
        %v383 = vld [vmem:[%s205 + $0x38] sm:$0xf]
        %v384 = vld [vmem:[%s205 + $0x3c] sm:$0xf]
        %v385 = vld [vmem:[%s344 + $0x1] sm:$0xff]
        %v386 = vld [vmem:[%s344 + $0x11] sm:$0xff]
        %v387 = vld [vmem:[%s344 + $0x21] sm:$0xff]
        %v388 = vld [vmem:[%s344 + $0x31] sm:$0xff]
        %v389 = vld [vmem:[%s344 + $0x41] sm:$0xff]
        %v390 = vld [vmem:[%s344 + $0x51] sm:$0xff]
        %v391 = vld [vmem:[%s344 + $0x61] sm:$0xff]
        %v392 = vld [vmem:[%s344 + $0x71] sm:$0xff]
        %v393 = vld [vmem:[%s344 + $0xa1] sm:$0xff]
        %v394 = vld [vmem:[%s344 + $0xb1] sm:$0xff]
        %v395 = vld [vmem:[%s344 + $0xc1] sm:$0xff]
        %v396 = vld [vmem:[%s344 + $0xd1] sm:$0xff]
        %v397 = vld [vmem:[%s344 + $0xe1] sm:$0xff]
        %v398 = vld [vmem:[%s344 + $0xf1] sm:$0xff]
        %v399 = vld [vmem:[%s344 + $0x101] sm:$0xff]
        %v400 = vld [vmem:[%s344 + $0x111] sm:$0xff]
        %v401 = vpack.c.bf16 %v386, %v385
        %v402 = vpack.c.bf16 %v388, %v387
        %v403 = vpack.c.bf16 %v390, %v389
        %v404 = vpack.c.bf16 %v392, %v391
        %v405 = vpack.c.bf16 %v394, %v393
        %v406 = vpack.c.bf16 %v396, %v395
        %v407 = vpack.c.bf16 %v398, %v397
        %v408 = vpack.c.bf16 %v400, %v399
        %v409 = vld [vmem:[%s205 + $0x40] sm:$0xf]
        %v410 = vld [vmem:[%s205 + $0x44] sm:$0xf]
        %v411 = vld [vmem:[%s205 + $0x48] sm:$0xf]
        %v412 = vld [vmem:[%s205 + $0x4c] sm:$0xf]
        %v413 = vld [vmem:[%s205 + $0x50] sm:$0xf]
        %v414 = vld [vmem:[%s205 + $0x54] sm:$0xf]
        %v415 = vld [vmem:[%s205 + $0x58] sm:$0xf]
        %v416 = vld [vmem:[%s205 + $0x5c] sm:$0xf]
        %v417 = vld [vmem:[%s205 + $0x60] sm:$0xf]
        %v418 = vld [vmem:[%s205 + $0x64] sm:$0xf]
        %v419 = vld [vmem:[%s205 + $0x68] sm:$0xf]
        %v420 = vld [vmem:[%s205 + $0x6c] sm:$0xf]
        %v421 = vld [vmem:[%s205 + $0x70] sm:$0xf]
        %v422 = vld [vmem:[%s205 + $0x74] sm:$0xf]
        %v423 = vld [vmem:[%s205 + $0x78] sm:$0xf]
        %v424 = vld [vmem:[%s205 + $0x7c] sm:$0xf]
        %v441 = vunpack.c.l.b16 %v409
        %v442 = vunpack.c.l.b16 %v410
        %v443 = vunpack.c.l.b16 %v411
        %v444 = vunpack.c.l.b16 %v412
        %v445 = vunpack.c.l.b16 %v413
        %v446 = vunpack.c.l.b16 %v414
        %v447 = vunpack.c.l.b16 %v415
        %v448 = vunpack.c.l.b16 %v416
        %v449 = vunpack.c.l.b16 %v417
        %v450 = vunpack.c.l.b16 %v418
        %v451 = vunpack.c.l.b16 %v419
        %v452 = vunpack.c.l.b16 %v420
        %v453 = vunpack.c.l.b16 %v421
        %v454 = vunpack.c.l.b16 %v422
        %v455 = vunpack.c.l.b16 %v423
        %v456 = vunpack.c.l.b16 %v424
        %v457 = vpack.c.b16 %v442, %v441
        %v458 = vpack.c.b16 %v444, %v443
        %v459 = vpack.c.b16 %v446, %v445
        %v460 = vpack.c.b16 %v448, %v447
        %v461 = vpack.c.b16 %v450, %v449
        %v462 = vpack.c.b16 %v452, %v451
        %v463 = vpack.c.b16 %v454, %v453
        %v464 = vpack.c.b16 %v456, %v455
        %473 = vmatprep.subr.bf16.mxu0 0
        %474 = vmatpush1.bf16.msra.mxu0 %v464
        %475 = vmatprep.subr.bf16.mxu0 0
        %476 = vmatpush1.bf16.msra.mxu0 %v463
        %477 = vmatprep.subr.bf16.mxu0 0
        %478 = vmatpush1.bf16.msra.mxu0 %v462
        %479 = vmatprep.subr.bf16.mxu0 0
        %480 = vmatpush1.bf16.msra.mxu0 %v461
        %481 = vmatprep.subr.bf16.mxu0 0
        %482 = vmatpush1.bf16.msra.mxu0 %v460
        %483 = vmatprep.subr.bf16.mxu0 0
        %484 = vmatpush1.bf16.msra.mxu0 %v459
        %485 = vmatprep.subr.bf16.mxu0 0
        %486 = vmatpush1.bf16.msra.mxu0 %v458
        %487 = vmatprep.subr.bf16.mxu0 0
        %488 = vmatpush1.bf16.msra.mxu0 %v457
        %489 = vmatprep.subr.bf16.mxu0 0
        %490 = vmatpush2.bf16.msra.mxu0 0
        %491 = vmatprep.subr.bf16.mxu0 0
        %492 = vmatpush2.bf16.msra.mxu0 0
        %493 = vmatprep.subr.bf16.mxu0 0
        %494 = vmatpush2.bf16.msra.mxu0 0
        %495 = vmatprep.subr.bf16.mxu0 0
        %496 = vmatpush2.bf16.msra.mxu0 0
        %497 = vmatprep.subr.bf16.mxu0 0
        %498 = vmatpush2.bf16.msra.mxu0 0
        %499 = vmatprep.subr.bf16.mxu0 0
        %500 = vmatpush2.bf16.msra.mxu0 0
        %501 = vmatprep.subr.bf16.mxu0 0
        %502 = vmatpush2.bf16.msra.mxu0 0
        %503 = vmatprep.subr.bf16.mxu0 0
        %504 = vmatpush2.bf16.msra.mxu0 0
        %505 = vmatprep.mubr.bf16.mxu0 0
        %506 = vmatmul.mubr.bf16.gmra.mxu0 %v401
        %v507 = vpop.f32.mrf.mxu0
        %v508 = vadd.f32 0.0, %v507
        %v509 = vpop.f32.mrf.mxu0
        %v510 = vpop.f32.mrf.mxu0
        %v511 = vadd.f32 0.0, %v510
        %v512 = vpop.f32.mrf.mxu0
        %513 = vmatprep.mubr.bf16.mxu0 0
        %514 = vmatmul.mubr.bf16.gmra.mxu0 %v402
        %v515 = vpop.f32.mrf.mxu0
        %v516 = vadd.f32 0.0, %v515
        %v517 = vpop.f32.mrf.mxu0
        %v518 = vpop.f32.mrf.mxu0
        %v519 = vadd.f32 0.0, %v518
        %v520 = vpop.f32.mrf.mxu0
        %521 = vmatprep.mubr.bf16.mxu0 0
        %522 = vmatmul.mubr.bf16.gmra.mxu0 %v403
        %v523 = vpop.f32.mrf.mxu0
        %v524 = vadd.f32 0.0, %v523
        %v525 = vpop.f32.mrf.mxu0
        %v526 = vpop.f32.mrf.mxu0
        %v527 = vadd.f32 0.0, %v526
        %v528 = vpop.f32.mrf.mxu0
        %529 = vmatprep.mubr.bf16.mxu0 0
        %530 = vmatmul.mubr.bf16.gmra.mxu0 %v404
        %v531 = vpop.f32.mrf.mxu0
        %v532 = vadd.f32 0.0, %v531
        %v533 = vpop.f32.mrf.mxu0
        %v534 = vpop.f32.mrf.mxu0
        %v535 = vadd.f32 0.0, %v534
        %v536 = vpop.f32.mrf.mxu0
        %537 = vmatprep.mubr.bf16.mxu0 0
        %538 = vmatmul.mubr.bf16.gmra.mxu0 %v405
        %v539 = vpop.f32.mrf.mxu0
        %v540 = vadd.f32 0.0, %v539
        %v541 = vpop.f32.mrf.mxu0
        %v542 = vpop.f32.mrf.mxu0
        %v543 = vadd.f32 0.0, %v542
        %v544 = vpop.f32.mrf.mxu0
        %545 = vmatprep.mubr.bf16.mxu0 0
        %546 = vmatmul.mubr.bf16.gmra.mxu0 %v406
        %v547 = vpop.f32.mrf.mxu0
        %v548 = vadd.f32 0.0, %v547
        %v549 = vpop.f32.mrf.mxu0
        %v550 = vpop.f32.mrf.mxu0
        %v551 = vadd.f32 0.0, %v550
        %v552 = vpop.f32.mrf.mxu0
        %553 = vmatprep.mubr.bf16.mxu0 0
        %554 = vmatmul.mubr.bf16.gmra.mxu0 %v407
        %v555 = vpop.f32.mrf.mxu0
        %v556 = vadd.f32 0.0, %v555
        %v557 = vpop.f32.mrf.mxu0
        %v558 = vpop.f32.mrf.mxu0
        %v559 = vadd.f32 0.0, %v558
        %v560 = vpop.f32.mrf.mxu0
        %561 = vmatprep.mubr.bf16.mxu0 0
        %562 = vmatmul.mubr.bf16.gmra.mxu0 %v408
        %v563 = vpop.f32.mrf.mxu0
        %v564 = vadd.f32 0.0, %v563
        %v565 = vpop.f32.mrf.mxu0
        %v566 = vpop.f32.mrf.mxu0
        %v567 = vadd.f32 0.0, %v566
        %v568 = vpop.f32.mrf.mxu0
        %569 = vdwg.mxu0
        %v586 = vunpack.c.l.b16 %v369
        %v587 = vunpack.c.l.b16 %v370
        %v588 = vunpack.c.l.b16 %v371
        %v589 = vunpack.c.l.b16 %v372
        %v590 = vunpack.c.l.b16 %v373
        %v591 = vunpack.c.l.b16 %v374
        %v592 = vunpack.c.l.b16 %v375
        %v593 = vunpack.c.l.b16 %v376
        %v594 = vunpack.c.l.b16 %v377
        %v595 = vunpack.c.l.b16 %v378
        %v596 = vunpack.c.l.b16 %v379
        %v597 = vunpack.c.l.b16 %v380
        %v598 = vunpack.c.l.b16 %v381
        %v599 = vunpack.c.l.b16 %v382
        %v600 = vunpack.c.l.b16 %v383
        %v601 = vunpack.c.l.b16 %v384
        %v602 = vpack.c.b16 %v587, %v586
        %v603 = vpack.c.b16 %v589, %v588
        %v604 = vpack.c.b16 %v591, %v590
        %v605 = vpack.c.b16 %v593, %v592
        %v606 = vpack.c.b16 %v595, %v594
        %v607 = vpack.c.b16 %v597, %v596
        %v608 = vpack.c.b16 %v599, %v598
        %v609 = vpack.c.b16 %v601, %v600
        %618 = vmatprep.subr.bf16.mxu0 0
        %619 = vmatpush1.bf16.msra.mxu0 %v609
        %620 = vmatprep.subr.bf16.mxu0 0
        %621 = vmatpush1.bf16.msra.mxu0 %v608
        %622 = vmatprep.subr.bf16.mxu0 0
        %623 = vmatpush1.bf16.msra.mxu0 %v607
        %624 = vmatprep.subr.bf16.mxu0 0
        %625 = vmatpush1.bf16.msra.mxu0 %v606
        %626 = vmatprep.subr.bf16.mxu0 0
        %627 = vmatpush1.bf16.msra.mxu0 %v605
        %628 = vmatprep.subr.bf16.mxu0 0
        %629 = vmatpush1.bf16.msra.mxu0 %v604
        %630 = vmatprep.subr.bf16.mxu0 0
        %631 = vmatpush1.bf16.msra.mxu0 %v603
        %632 = vmatprep.subr.bf16.mxu0 0
        %633 = vmatpush1.bf16.msra.mxu0 %v602
        %634 = vmatprep.subr.bf16.mxu0 0
        %635 = vmatpush2.bf16.msra.mxu0 0
        %636 = vmatprep.subr.bf16.mxu0 0
        %637 = vmatpush2.bf16.msra.mxu0 0
        %638 = vmatprep.subr.bf16.mxu0 0
        %639 = vmatpush2.bf16.msra.mxu0 0
        %640 = vmatprep.subr.bf16.mxu0 0
        %641 = vmatpush2.bf16.msra.mxu0 0
        %642 = vmatprep.subr.bf16.mxu0 0
        %643 = vmatpush2.bf16.msra.mxu0 0
        %644 = vmatprep.subr.bf16.mxu0 0
        %645 = vmatpush2.bf16.msra.mxu0 0
        %646 = vmatprep.subr.bf16.mxu0 0
        %647 = vmatpush2.bf16.msra.mxu0 0
        %648 = vmatprep.subr.bf16.mxu0 0
        %649 = vmatpush2.bf16.msra.mxu0 0
        %650 = vmatprep.mubr.bf16.mxu0 0
        %651 = vmatmul.mubr.bf16.gmra.mxu0 %v361
        %v652 = vpop.f32.mrf.mxu0
        %v653 = vadd.f32 %v508, %v652
        %v654 = vpop.f32.mrf.mxu0
        %v655 = vpop.f32.mrf.mxu0
        %v656 = vadd.f32 %v511, %v655
        %v657 = vpop.f32.mrf.mxu0
        %658 = vmatprep.mubr.bf16.mxu0 0
        %659 = vmatmul.mubr.bf16.gmra.mxu0 %v362
        %v660 = vpop.f32.mrf.mxu0
        %v661 = vadd.f32 %v516, %v660
        %v662 = vpop.f32.mrf.mxu0
        %v663 = vpop.f32.mrf.mxu0
        %v664 = vadd.f32 %v519, %v663
        %v665 = vpop.f32.mrf.mxu0
        %666 = vmatprep.mubr.bf16.mxu0 0
        %667 = vmatmul.mubr.bf16.gmra.mxu0 %v363
        %v668 = vpop.f32.mrf.mxu0
        %v669 = vadd.f32 %v524, %v668
        %v670 = vpop.f32.mrf.mxu0
        %v671 = vpop.f32.mrf.mxu0
        %v672 = vadd.f32 %v527, %v671
        %v673 = vpop.f32.mrf.mxu0
        %674 = vmatprep.mubr.bf16.mxu0 0
        %675 = vmatmul.mubr.bf16.gmra.mxu0 %v364
        %v676 = vpop.f32.mrf.mxu0
        %v677 = vadd.f32 %v532, %v676
        %v678 = vpop.f32.mrf.mxu0
        %v679 = vpop.f32.mrf.mxu0
        %v680 = vadd.f32 %v535, %v679
        %v681 = vpop.f32.mrf.mxu0
        %682 = vmatprep.mubr.bf16.mxu0 0
        %683 = vmatmul.mubr.bf16.gmra.mxu0 %v365
        %v684 = vpop.f32.mrf.mxu0
        %v685 = vadd.f32 %v540, %v684
        %v686 = vpop.f32.mrf.mxu0
        %v687 = vpop.f32.mrf.mxu0
        %v688 = vadd.f32 %v543, %v687
        %v689 = vpop.f32.mrf.mxu0
        %690 = vmatprep.mubr.bf16.mxu0 0
        %691 = vmatmul.mubr.bf16.gmra.mxu0 %v366
        %v692 = vpop.f32.mrf.mxu0
        %v693 = vadd.f32 %v548, %v692
        %v694 = vpop.f32.mrf.mxu0
        %v695 = vpop.f32.mrf.mxu0
        %v696 = vadd.f32 %v551, %v695
        %v697 = vpop.f32.mrf.mxu0
        %698 = vmatprep.mubr.bf16.mxu0 0
        %699 = vmatmul.mubr.bf16.gmra.mxu0 %v367
        %v700 = vpop.f32.mrf.mxu0
        %v701 = vadd.f32 %v556, %v700
        %v702 = vpop.f32.mrf.mxu0
        %v703 = vpop.f32.mrf.mxu0
        %v704 = vadd.f32 %v559, %v703
        %v705 = vpop.f32.mrf.mxu0
        %706 = vmatprep.mubr.bf16.mxu0 0
        %707 = vmatmul.mubr.bf16.gmra.mxu0 %v368
        %v708 = vpop.f32.mrf.mxu0
        %v709 = vadd.f32 %v564, %v708
        %v710 = vpop.f32.mrf.mxu0
        %v711 = vpop.f32.mrf.mxu0
        %v712 = vadd.f32 %v567, %v711
        %v713 = vpop.f32.mrf.mxu0
        %714 = vdwg.mxu0
        %v715 = vld [vmem:[%s344 + $0x2] sm:$0xff]
        %v716 = vld [vmem:[%s344 + $0x12] sm:$0xff]
        %v717 = vld [vmem:[%s344 + $0x22] sm:$0xff]
        %v718 = vld [vmem:[%s344 + $0x32] sm:$0xff]
        %v719 = vld [vmem:[%s344 + $0x42] sm:$0xff]
        %v720 = vld [vmem:[%s344 + $0x52] sm:$0xff]
        %v721 = vld [vmem:[%s344 + $0x62] sm:$0xff]
        %v722 = vld [vmem:[%s344 + $0x72] sm:$0xff]
        %v723 = vld [vmem:[%s344 + $0xa2] sm:$0xff]
        %v724 = vld [vmem:[%s344 + $0xb2] sm:$0xff]
        %v725 = vld [vmem:[%s344 + $0xc2] sm:$0xff]
        %v726 = vld [vmem:[%s344 + $0xd2] sm:$0xff]
        %v727 = vld [vmem:[%s344 + $0xe2] sm:$0xff]
        %v728 = vld [vmem:[%s344 + $0xf2] sm:$0xff]
        %v729 = vld [vmem:[%s344 + $0x102] sm:$0xff]
        %v730 = vld [vmem:[%s344 + $0x112] sm:$0xff]
        %v731 = vpack.c.bf16 %v716, %v715
        %v732 = vpack.c.bf16 %v718, %v717
        %v733 = vpack.c.bf16 %v720, %v719
        %v734 = vpack.c.bf16 %v722, %v721
        %v735 = vpack.c.bf16 %v724, %v723
        %v736 = vpack.c.bf16 %v726, %v725
        %v737 = vpack.c.bf16 %v728, %v727
        %v738 = vpack.c.bf16 %v730, %v729
        %v739 = vld [vmem:[%s205 + $0x80] sm:$0xf]
        %v740 = vld [vmem:[%s205 + $0x84] sm:$0xf]
        %v741 = vld [vmem:[%s205 + $0x88] sm:$0xf]
        %v742 = vld [vmem:[%s205 + $0x8c] sm:$0xf]
        %v743 = vld [vmem:[%s205 + $0x90] sm:$0xf]
        %v744 = vld [vmem:[%s205 + $0x94] sm:$0xf]
        %v745 = vld [vmem:[%s205 + $0x98] sm:$0xf]
        %v746 = vld [vmem:[%s205 + $0x9c] sm:$0xf]
        %v747 = vld [vmem:[%s205 + $0xa0] sm:$0xf]
        %v748 = vld [vmem:[%s205 + $0xa4] sm:$0xf]
        %v749 = vld [vmem:[%s205 + $0xa8] sm:$0xf]
        %v750 = vld [vmem:[%s205 + $0xac] sm:$0xf]
        %v751 = vld [vmem:[%s205 + $0xb0] sm:$0xf]
        %v752 = vld [vmem:[%s205 + $0xb4] sm:$0xf]
        %v753 = vld [vmem:[%s205 + $0xb8] sm:$0xf]
        %v754 = vld [vmem:[%s205 + $0xbc] sm:$0xf]
        %v771 = vunpack.c.l.b16 %v739
        %v772 = vunpack.c.l.b16 %v740
        %v773 = vunpack.c.l.b16 %v741
        %v774 = vunpack.c.l.b16 %v742
        %v775 = vunpack.c.l.b16 %v743
        %v776 = vunpack.c.l.b16 %v744
        %v777 = vunpack.c.l.b16 %v745
        %v778 = vunpack.c.l.b16 %v746
        %v779 = vunpack.c.l.b16 %v747
        %v780 = vunpack.c.l.b16 %v748
        %v781 = vunpack.c.l.b16 %v749
        %v782 = vunpack.c.l.b16 %v750
        %v783 = vunpack.c.l.b16 %v751
        %v784 = vunpack.c.l.b16 %v752
        %v785 = vunpack.c.l.b16 %v753
        %v786 = vunpack.c.l.b16 %v754
        %v787 = vpack.c.b16 %v772, %v771
        %v788 = vpack.c.b16 %v774, %v773
        %v789 = vpack.c.b16 %v776, %v775
        %v790 = vpack.c.b16 %v778, %v777
        %v791 = vpack.c.b16 %v780, %v779
        %v792 = vpack.c.b16 %v782, %v781
        %v793 = vpack.c.b16 %v784, %v783
        %v794 = vpack.c.b16 %v786, %v785
        %803 = vmatprep.subr.bf16.mxu0 0
        %804 = vmatpush1.bf16.msra.mxu0 %v794
        %805 = vmatprep.subr.bf16.mxu0 0
        %806 = vmatpush1.bf16.msra.mxu0 %v793
        %807 = vmatprep.subr.bf16.mxu0 0
        %808 = vmatpush1.bf16.msra.mxu0 %v792
        %809 = vmatprep.subr.bf16.mxu0 0
        %810 = vmatpush1.bf16.msra.mxu0 %v791
        %811 = vmatprep.subr.bf16.mxu0 0
        %812 = vmatpush1.bf16.msra.mxu0 %v790
        %813 = vmatprep.subr.bf16.mxu0 0
        %814 = vmatpush1.bf16.msra.mxu0 %v789
        %815 = vmatprep.subr.bf16.mxu0 0
        %816 = vmatpush1.bf16.msra.mxu0 %v788
        %817 = vmatprep.subr.bf16.mxu0 0
        %818 = vmatpush1.bf16.msra.mxu0 %v787
        %819 = vmatprep.subr.bf16.mxu0 0
        %820 = vmatpush2.bf16.msra.mxu0 0
        %821 = vmatprep.subr.bf16.mxu0 0
        %822 = vmatpush2.bf16.msra.mxu0 0
        %823 = vmatprep.subr.bf16.mxu0 0
        %824 = vmatpush2.bf16.msra.mxu0 0
        %825 = vmatprep.subr.bf16.mxu0 0
        %826 = vmatpush2.bf16.msra.mxu0 0
        %827 = vmatprep.subr.bf16.mxu0 0
        %828 = vmatpush2.bf16.msra.mxu0 0
        %829 = vmatprep.subr.bf16.mxu0 0
        %830 = vmatpush2.bf16.msra.mxu0 0
        %831 = vmatprep.subr.bf16.mxu0 0
        %832 = vmatpush2.bf16.msra.mxu0 0
        %833 = vmatprep.subr.bf16.mxu0 0
        %834 = vmatpush2.bf16.msra.mxu0 0
        %835 = vmatprep.mubr.bf16.mxu0 0
        %836 = vmatmul.mubr.bf16.gmra.mxu0 %v731
        %v837 = vpop.f32.mrf.mxu0
        %v838 = vadd.f32 0.0, %v837
        %v839 = vpop.f32.mrf.mxu0
        %v840 = vpop.f32.mrf.mxu0
        %v841 = vadd.f32 0.0, %v840
        %v842 = vpop.f32.mrf.mxu0
        %843 = vmatprep.mubr.bf16.mxu0 0
        %844 = vmatmul.mubr.bf16.gmra.mxu0 %v732
        %v845 = vpop.f32.mrf.mxu0
        %v846 = vadd.f32 0.0, %v845
        %v847 = vpop.f32.mrf.mxu0
        %v848 = vpop.f32.mrf.mxu0
        %v849 = vadd.f32 0.0, %v848
        %v850 = vpop.f32.mrf.mxu0
        %851 = vmatprep.mubr.bf16.mxu0 0
        %852 = vmatmul.mubr.bf16.gmra.mxu0 %v733
        %v853 = vpop.f32.mrf.mxu0
        %v854 = vadd.f32 0.0, %v853
        %v855 = vpop.f32.mrf.mxu0
        %v856 = vpop.f32.mrf.mxu0
        %v857 = vadd.f32 0.0, %v856
        %v858 = vpop.f32.mrf.mxu0
        %859 = vmatprep.mubr.bf16.mxu0 0
        %860 = vmatmul.mubr.bf16.gmra.mxu0 %v734
        %v861 = vpop.f32.mrf.mxu0
        %v862 = vadd.f32 0.0, %v861
        %v863 = vpop.f32.mrf.mxu0
        %v864 = vpop.f32.mrf.mxu0
        %v865 = vadd.f32 0.0, %v864
        %v866 = vpop.f32.mrf.mxu0
        %867 = vmatprep.mubr.bf16.mxu0 0
        %868 = vmatmul.mubr.bf16.gmra.mxu0 %v735
        %v869 = vpop.f32.mrf.mxu0
        %v870 = vadd.f32 0.0, %v869
        %v871 = vpop.f32.mrf.mxu0
        %v872 = vpop.f32.mrf.mxu0
        %v873 = vadd.f32 0.0, %v872
        %v874 = vpop.f32.mrf.mxu0
        %875 = vmatprep.mubr.bf16.mxu0 0
        %876 = vmatmul.mubr.bf16.gmra.mxu0 %v736
        %v877 = vpop.f32.mrf.mxu0
        %v878 = vadd.f32 0.0, %v877
        %v879 = vpop.f32.mrf.mxu0
        %v880 = vpop.f32.mrf.mxu0
        %v881 = vadd.f32 0.0, %v880
        %v882 = vpop.f32.mrf.mxu0
        %883 = vmatprep.mubr.bf16.mxu0 0
        %884 = vmatmul.mubr.bf16.gmra.mxu0 %v737
        %v885 = vpop.f32.mrf.mxu0
        %v886 = vadd.f32 0.0, %v885
        %v887 = vpop.f32.mrf.mxu0
        %v888 = vpop.f32.mrf.mxu0
        %v889 = vadd.f32 0.0, %v888
        %v890 = vpop.f32.mrf.mxu0
        %891 = vmatprep.mubr.bf16.mxu0 0
        %892 = vmatmul.mubr.bf16.gmra.mxu0 %v738
        %v893 = vpop.f32.mrf.mxu0
        %v894 = vadd.f32 0.0, %v893
        %v895 = vpop.f32.mrf.mxu0
        %v896 = vpop.f32.mrf.mxu0
        %v897 = vadd.f32 0.0, %v896
        %v898 = vpop.f32.mrf.mxu0
        %899 = vdwg.mxu0
        %v900 = vadd.f32 %v653, %v838
        %v901 = vadd.f32 %v656, %v841
        %v902 = vadd.f32 %v661, %v846
        %v903 = vadd.f32 %v664, %v849
        %v904 = vadd.f32 %v669, %v854
        %v905 = vadd.f32 %v672, %v857
        %v906 = vadd.f32 %v677, %v862
        %v907 = vadd.f32 %v680, %v865
        %v908 = vadd.f32 %v685, %v870
        %v909 = vadd.f32 %v688, %v873
        %v910 = vadd.f32 %v693, %v878
        %v911 = vadd.f32 %v696, %v881
        %v912 = vadd.f32 %v701, %v886
        %v913 = vadd.f32 %v704, %v889
        %v914 = vadd.f32 %v709, %v894
        %v915 = vadd.f32 %v712, %v897
        %s916 = sadd.s32 16, %s343
        %s917 = scalar_lea.vmem [#allocation2], %s916
        %v918 = vld [vmem:[%s917] sm:$0xff]
        %v919 = vld [vmem:[%s917 + $0x10] sm:$0xff]
        %v920 = vld [vmem:[%s917 + $0x20] sm:$0xff]
        %v921 = vld [vmem:[%s917 + $0x30] sm:$0xff]
        %v922 = vld [vmem:[%s917 + $0x40] sm:$0xff]
        %v923 = vld [vmem:[%s917 + $0x50] sm:$0xff]
        %v924 = vld [vmem:[%s917 + $0x60] sm:$0xff]
        %v925 = vld [vmem:[%s917 + $0x70] sm:$0xff]
        %v926 = vld [vmem:[%s917 + $0xa0] sm:$0xff]
        %v927 = vld [vmem:[%s917 + $0xb0] sm:$0xff]
        %v928 = vld [vmem:[%s917 + $0xc0] sm:$0xff]
        %v929 = vld [vmem:[%s917 + $0xd0] sm:$0xff]
        %v930 = vld [vmem:[%s917 + $0xe0] sm:$0xff]
        %v931 = vld [vmem:[%s917 + $0xf0] sm:$0xff]
        %v932 = vld [vmem:[%s917 + $0x100] sm:$0xff]
        %v933 = vld [vmem:[%s917 + $0x110] sm:$0xff]
        %v934 = vpack.c.bf16 %v919, %v918
        %v935 = vpack.c.bf16 %v921, %v920
        %v936 = vpack.c.bf16 %v923, %v922
        %v937 = vpack.c.bf16 %v925, %v924
        %v938 = vpack.c.bf16 %v927, %v926
        %v939 = vpack.c.bf16 %v929, %v928
        %v940 = vpack.c.bf16 %v931, %v930
        %v941 = vpack.c.bf16 %v933, %v932
        %v942 = vld [vmem:[%s205 + $0xc0] sm:$0xf]
        %v943 = vld [vmem:[%s205 + $0xc4] sm:$0xf]
        %v944 = vld [vmem:[%s205 + $0xc8] sm:$0xf]
        %v945 = vld [vmem:[%s205 + $0xcc] sm:$0xf]
        %v946 = vld [vmem:[%s205 + $0xd0] sm:$0xf]
        %v947 = vld [vmem:[%s205 + $0xd4] sm:$0xf]
        %v948 = vld [vmem:[%s205 + $0xd8] sm:$0xf]
        %v949 = vld [vmem:[%s205 + $0xdc] sm:$0xf]
        %v950 = vld [vmem:[%s205 + $0xe0] sm:$0xf]
        %v951 = vld [vmem:[%s205 + $0xe4] sm:$0xf]
        %v952 = vld [vmem:[%s205 + $0xe8] sm:$0xf]
        %v953 = vld [vmem:[%s205 + $0xec] sm:$0xf]
        %v954 = vld [vmem:[%s205 + $0xf0] sm:$0xf]
        %v955 = vld [vmem:[%s205 + $0xf4] sm:$0xf]
        %v956 = vld [vmem:[%s205 + $0xf8] sm:$0xf]
        %v957 = vld [vmem:[%s205 + $0xfc] sm:$0xf]
        %v974 = vunpack.c.l.b16 %v942
        %v975 = vunpack.c.l.b16 %v943
        %v976 = vunpack.c.l.b16 %v944
        %v977 = vunpack.c.l.b16 %v945
        %v978 = vunpack.c.l.b16 %v946
        %v979 = vunpack.c.l.b16 %v947
        %v980 = vunpack.c.l.b16 %v948
        %v981 = vunpack.c.l.b16 %v949
        %v982 = vunpack.c.l.b16 %v950
        %v983 = vunpack.c.l.b16 %v951
        %v984 = vunpack.c.l.b16 %v952
        %v985 = vunpack.c.l.b16 %v953
        %v986 = vunpack.c.l.b16 %v954
        %v987 = vunpack.c.l.b16 %v955
        %v988 = vunpack.c.l.b16 %v956
        %v989 = vunpack.c.l.b16 %v957
        %v990 = vpack.c.b16 %v975, %v974
        %v991 = vpack.c.b16 %v977, %v976
        %v992 = vpack.c.b16 %v979, %v978
        %v993 = vpack.c.b16 %v981, %v980
        %v994 = vpack.c.b16 %v983, %v982
        %v995 = vpack.c.b16 %v985, %v984
        %v996 = vpack.c.b16 %v987, %v986
        %v997 = vpack.c.b16 %v989, %v988
        %1006 = vmatprep.subr.bf16.mxu0 0
        %1007 = vmatpush1.bf16.msra.mxu0 %v997
        %1008 = vmatprep.subr.bf16.mxu0 0
        %1009 = vmatpush1.bf16.msra.mxu0 %v996
        %1010 = vmatprep.subr.bf16.mxu0 0
        %1011 = vmatpush1.bf16.msra.mxu0 %v995
        %1012 = vmatprep.subr.bf16.mxu0 0
        %1013 = vmatpush1.bf16.msra.mxu0 %v994
        %1014 = vmatprep.subr.bf16.mxu0 0
        %1015 = vmatpush1.bf16.msra.mxu0 %v993
        %1016 = vmatprep.subr.bf16.mxu0 0
        %1017 = vmatpush1.bf16.msra.mxu0 %v992
        %1018 = vmatprep.subr.bf16.mxu0 0
        %1019 = vmatpush1.bf16.msra.mxu0 %v991
        %1020 = vmatprep.subr.bf16.mxu0 0
        %1021 = vmatpush1.bf16.msra.mxu0 %v990
        %1022 = vmatprep.subr.bf16.mxu0 0
        %1023 = vmatpush2.bf16.msra.mxu0 0
        %1024 = vmatprep.subr.bf16.mxu0 0
        %1025 = vmatpush2.bf16.msra.mxu0 0
        %1026 = vmatprep.subr.bf16.mxu0 0
        %1027 = vmatpush2.bf16.msra.mxu0 0
        %1028 = vmatprep.subr.bf16.mxu0 0
        %1029 = vmatpush2.bf16.msra.mxu0 0
        %1030 = vmatprep.subr.bf16.mxu0 0
        %1031 = vmatpush2.bf16.msra.mxu0 0
        %1032 = vmatprep.subr.bf16.mxu0 0
        %1033 = vmatpush2.bf16.msra.mxu0 0
        %1034 = vmatprep.subr.bf16.mxu0 0
        %1035 = vmatpush2.bf16.msra.mxu0 0
        %1036 = vmatprep.subr.bf16.mxu0 0
        %1037 = vmatpush2.bf16.msra.mxu0 0
        %1038 = vmatprep.mubr.bf16.mxu0 0
        %1039 = vmatmul.mubr.bf16.gmra.mxu0 %v934
        %v1040 = vpop.f32.mrf.mxu0
        %v1041 = vadd.f32 0.0, %v1040
        %v1042 = vpop.f32.mrf.mxu0
        %v1043 = vpop.f32.mrf.mxu0
        %v1044 = vadd.f32 0.0, %v1043
        %v1045 = vpop.f32.mrf.mxu0
        %1046 = vmatprep.mubr.bf16.mxu0 0
        %1047 = vmatmul.mubr.bf16.gmra.mxu0 %v935
        %v1048 = vpop.f32.mrf.mxu0
        %v1049 = vadd.f32 0.0, %v1048
        %v1050 = vpop.f32.mrf.mxu0
        %v1051 = vpop.f32.mrf.mxu0
        %v1052 = vadd.f32 0.0, %v1051
        %v1053 = vpop.f32.mrf.mxu0
        %1054 = vmatprep.mubr.bf16.mxu0 0
        %1055 = vmatmul.mubr.bf16.gmra.mxu0 %v936
        %v1056 = vpop.f32.mrf.mxu0
        %v1057 = vadd.f32 0.0, %v1056
        %v1058 = vpop.f32.mrf.mxu0
        %v1059 = vpop.f32.mrf.mxu0
        %v1060 = vadd.f32 0.0, %v1059
        %v1061 = vpop.f32.mrf.mxu0
        %1062 = vmatprep.mubr.bf16.mxu0 0
        %1063 = vmatmul.mubr.bf16.gmra.mxu0 %v937
        %v1064 = vpop.f32.mrf.mxu0
        %v1065 = vadd.f32 0.0, %v1064
        %v1066 = vpop.f32.mrf.mxu0
        %v1067 = vpop.f32.mrf.mxu0
        %v1068 = vadd.f32 0.0, %v1067
        %v1069 = vpop.f32.mrf.mxu0
        %1070 = vmatprep.mubr.bf16.mxu0 0
        %1071 = vmatmul.mubr.bf16.gmra.mxu0 %v938
        %v1072 = vpop.f32.mrf.mxu0
        %v1073 = vadd.f32 0.0, %v1072
        %v1074 = vpop.f32.mrf.mxu0
        %v1075 = vpop.f32.mrf.mxu0
        %v1076 = vadd.f32 0.0, %v1075
        %v1077 = vpop.f32.mrf.mxu0
        %1078 = vmatprep.mubr.bf16.mxu0 0
        %1079 = vmatmul.mubr.bf16.gmra.mxu0 %v939
        %v1080 = vpop.f32.mrf.mxu0
        %v1081 = vadd.f32 0.0, %v1080
        %v1082 = vpop.f32.mrf.mxu0
        %v1083 = vpop.f32.mrf.mxu0
        %v1084 = vadd.f32 0.0, %v1083
        %v1085 = vpop.f32.mrf.mxu0
        %1086 = vmatprep.mubr.bf16.mxu0 0
        %1087 = vmatmul.mubr.bf16.gmra.mxu0 %v940
        %v1088 = vpop.f32.mrf.mxu0
        %v1089 = vadd.f32 0.0, %v1088
        %v1090 = vpop.f32.mrf.mxu0
        %v1091 = vpop.f32.mrf.mxu0
        %v1092 = vadd.f32 0.0, %v1091
        %v1093 = vpop.f32.mrf.mxu0
        %1094 = vmatprep.mubr.bf16.mxu0 0
        %1095 = vmatmul.mubr.bf16.gmra.mxu0 %v941
        %v1096 = vpop.f32.mrf.mxu0
        %v1097 = vadd.f32 0.0, %v1096
        %v1098 = vpop.f32.mrf.mxu0
        %v1099 = vpop.f32.mrf.mxu0
        %v1100 = vadd.f32 0.0, %v1099
        %v1101 = vpop.f32.mrf.mxu0
        %1102 = vdwg.mxu0
        %v1103 = vadd.f32 %v900, %v1041
        %v1104 = vadd.f32 %v901, %v1044
        %v1105 = vadd.f32 %v902, %v1049
        %v1106 = vadd.f32 %v903, %v1052
        %v1107 = vadd.f32 %v904, %v1057
        %v1108 = vadd.f32 %v905, %v1060
        %v1109 = vadd.f32 %v906, %v1065
        %v1110 = vadd.f32 %v907, %v1068
        %v1111 = vadd.f32 %v908, %v1073
        %v1112 = vadd.f32 %v909, %v1076
        %v1113 = vadd.f32 %v910, %v1081
        %v1114 = vadd.f32 %v911, %v1084
        %v1115 = vadd.f32 %v912, %v1089
        %v1116 = vadd.f32 %v913, %v1092
        %v1117 = vadd.f32 %v914, %v1097
        %v1118 = vadd.f32 %v915, %v1100
        %v1119 = vld [vmem:[%s917 + $0x1] sm:$0xff]
        %v1120 = vld [vmem:[%s917 + $0x11] sm:$0xff]
        %v1121 = vld [vmem:[%s917 + $0x21] sm:$0xff]
        %v1122 = vld [vmem:[%s917 + $0x31] sm:$0xff]
        %v1123 = vld [vmem:[%s917 + $0x41] sm:$0xff]
        %v1124 = vld [vmem:[%s917 + $0x51] sm:$0xff]
        %v1125 = vld [vmem:[%s917 + $0x61] sm:$0xff]
        %v1126 = vld [vmem:[%s917 + $0x71] sm:$0xff]
        %v1127 = vld [vmem:[%s917 + $0xa1] sm:$0xff]
        %v1128 = vld [vmem:[%s917 + $0xb1] sm:$0xff]
        %v1129 = vld [vmem:[%s917 + $0xc1] sm:$0xff]
        %v1130 = vld [vmem:[%s917 + $0xd1] sm:$0xff]
        %v1131 = vld [vmem:[%s917 + $0xe1] sm:$0xff]
        %v1132 = vld [vmem:[%s917 + $0xf1] sm:$0xff]
        %v1133 = vld [vmem:[%s917 + $0x101] sm:$0xff]
        %v1134 = vld [vmem:[%s917 + $0x111] sm:$0xff]
        %v1135 = vpack.c.bf16 %v1120, %v1119
        %v1136 = vpack.c.bf16 %v1122, %v1121
        %v1137 = vpack.c.bf16 %v1124, %v1123
        %v1138 = vpack.c.bf16 %v1126, %v1125
        %v1139 = vpack.c.bf16 %v1128, %v1127
        %v1140 = vpack.c.bf16 %v1130, %v1129
        %v1141 = vpack.c.bf16 %v1132, %v1131
        %v1142 = vpack.c.bf16 %v1134, %v1133
        %v1143 = vld [vmem:[%s205 + $0x100] sm:$0xf]
        %v1144 = vld [vmem:[%s205 + $0x104] sm:$0xf]
        %v1145 = vld [vmem:[%s205 + $0x108] sm:$0xf]
        %v1146 = vld [vmem:[%s205 + $0x10c] sm:$0xf]
        %v1147 = vld [vmem:[%s205 + $0x110] sm:$0xf]
        %v1148 = vld [vmem:[%s205 + $0x114] sm:$0xf]
        %v1149 = vld [vmem:[%s205 + $0x118] sm:$0xf]
        %v1150 = vld [vmem:[%s205 + $0x11c] sm:$0xf]
        %v1151 = vld [vmem:[%s205 + $0x120] sm:$0xf]
        %v1152 = vld [vmem:[%s205 + $0x124] sm:$0xf]
        %v1153 = vld [vmem:[%s205 + $0x128] sm:$0xf]
        %v1154 = vld [vmem:[%s205 + $0x12c] sm:$0xf]
        %v1155 = vld [vmem:[%s205 + $0x130] sm:$0xf]
        %v1156 = vld [vmem:[%s205 + $0x134] sm:$0xf]
        %v1157 = vld [vmem:[%s205 + $0x138] sm:$0xf]
        %v1158 = vld [vmem:[%s205 + $0x13c] sm:$0xf]
        %v1175 = vunpack.c.l.b16 %v1143
        %v1176 = vunpack.c.l.b16 %v1144
        %v1177 = vunpack.c.l.b16 %v1145
        %v1178 = vunpack.c.l.b16 %v1146
        %v1179 = vunpack.c.l.b16 %v1147
        %v1180 = vunpack.c.l.b16 %v1148
        %v1181 = vunpack.c.l.b16 %v1149
        %v1182 = vunpack.c.l.b16 %v1150
        %v1183 = vunpack.c.l.b16 %v1151
        %v1184 = vunpack.c.l.b16 %v1152
        %v1185 = vunpack.c.l.b16 %v1153
        %v1186 = vunpack.c.l.b16 %v1154
        %v1187 = vunpack.c.l.b16 %v1155
        %v1188 = vunpack.c.l.b16 %v1156
        %v1189 = vunpack.c.l.b16 %v1157
        %v1190 = vunpack.c.l.b16 %v1158
        %v1191 = vpack.c.b16 %v1176, %v1175
        %v1192 = vpack.c.b16 %v1178, %v1177
        %v1193 = vpack.c.b16 %v1180, %v1179
        %v1194 = vpack.c.b16 %v1182, %v1181
        %v1195 = vpack.c.b16 %v1184, %v1183
        %v1196 = vpack.c.b16 %v1186, %v1185
        %v1197 = vpack.c.b16 %v1188, %v1187
        %v1198 = vpack.c.b16 %v1190, %v1189
        %1207 = vmatprep.subr.bf16.mxu0 0
        %1208 = vmatpush1.bf16.msra.mxu0 %v1198
        %1209 = vmatprep.subr.bf16.mxu0 0
        %1210 = vmatpush1.bf16.msra.mxu0 %v1197
        %1211 = vmatprep.subr.bf16.mxu0 0
        %1212 = vmatpush1.bf16.msra.mxu0 %v1196
        %1213 = vmatprep.subr.bf16.mxu0 0
        %1214 = vmatpush1.bf16.msra.mxu0 %v1195
        %1215 = vmatprep.subr.bf16.mxu0 0
        %1216 = vmatpush1.bf16.msra.mxu0 %v1194
        %1217 = vmatprep.subr.bf16.mxu0 0
        %1218 = vmatpush1.bf16.msra.mxu0 %v1193
        %1219 = vmatprep.subr.bf16.mxu0 0
        %1220 = vmatpush1.bf16.msra.mxu0 %v1192
        %1221 = vmatprep.subr.bf16.mxu0 0
        %1222 = vmatpush1.bf16.msra.mxu0 %v1191
        %1223 = vmatprep.subr.bf16.mxu0 0
        %1224 = vmatpush2.bf16.msra.mxu0 0
        %1225 = vmatprep.subr.bf16.mxu0 0
        %1226 = vmatpush2.bf16.msra.mxu0 0
        %1227 = vmatprep.subr.bf16.mxu0 0
        %1228 = vmatpush2.bf16.msra.mxu0 0
        %1229 = vmatprep.subr.bf16.mxu0 0
        %1230 = vmatpush2.bf16.msra.mxu0 0
        %1231 = vmatprep.subr.bf16.mxu0 0
        %1232 = vmatpush2.bf16.msra.mxu0 0
        %1233 = vmatprep.subr.bf16.mxu0 0
        %1234 = vmatpush2.bf16.msra.mxu0 0
        %1235 = vmatprep.subr.bf16.mxu0 0
        %1236 = vmatpush2.bf16.msra.mxu0 0
        %1237 = vmatprep.subr.bf16.mxu0 0
        %1238 = vmatpush2.bf16.msra.mxu0 0
        %1239 = vmatprep.mubr.bf16.mxu0 0
        %1240 = vmatmul.mubr.bf16.gmra.mxu0 %v1135
        %v1241 = vpop.f32.mrf.mxu0
        %v1242 = vadd.f32 0.0, %v1241
        %v1243 = vpop.f32.mrf.mxu0
        %v1244 = vpop.f32.mrf.mxu0
        %v1245 = vadd.f32 0.0, %v1244
        %v1246 = vpop.f32.mrf.mxu0
        %1247 = vmatprep.mubr.bf16.mxu0 0
        %1248 = vmatmul.mubr.bf16.gmra.mxu0 %v1136
        %v1249 = vpop.f32.mrf.mxu0
        %v1250 = vadd.f32 0.0, %v1249
        %v1251 = vpop.f32.mrf.mxu0
        %v1252 = vpop.f32.mrf.mxu0
        %v1253 = vadd.f32 0.0, %v1252
        %v1254 = vpop.f32.mrf.mxu0
        %1255 = vmatprep.mubr.bf16.mxu0 0
        %1256 = vmatmul.mubr.bf16.gmra.mxu0 %v1137
        %v1257 = vpop.f32.mrf.mxu0
        %v1258 = vadd.f32 0.0, %v1257
        %v1259 = vpop.f32.mrf.mxu0
        %v1260 = vpop.f32.mrf.mxu0
        %v1261 = vadd.f32 0.0, %v1260
        %v1262 = vpop.f32.mrf.mxu0
        %1263 = vmatprep.mubr.bf16.mxu0 0
        %1264 = vmatmul.mubr.bf16.gmra.mxu0 %v1138
        %v1265 = vpop.f32.mrf.mxu0
        %v1266 = vadd.f32 0.0, %v1265
        %v1267 = vpop.f32.mrf.mxu0
        %v1268 = vpop.f32.mrf.mxu0
        %v1269 = vadd.f32 0.0, %v1268
        %v1270 = vpop.f32.mrf.mxu0
        %1271 = vmatprep.mubr.bf16.mxu0 0
        %1272 = vmatmul.mubr.bf16.gmra.mxu0 %v1139
        %v1273 = vpop.f32.mrf.mxu0
        %v1274 = vadd.f32 0.0, %v1273
        %v1275 = vpop.f32.mrf.mxu0
        %v1276 = vpop.f32.mrf.mxu0
        %v1277 = vadd.f32 0.0, %v1276
        %v1278 = vpop.f32.mrf.mxu0
        %1279 = vmatprep.mubr.bf16.mxu0 0
        %1280 = vmatmul.mubr.bf16.gmra.mxu0 %v1140
        %v1281 = vpop.f32.mrf.mxu0
        %v1282 = vadd.f32 0.0, %v1281
        %v1283 = vpop.f32.mrf.mxu0
        %v1284 = vpop.f32.mrf.mxu0
        %v1285 = vadd.f32 0.0, %v1284
        %v1286 = vpop.f32.mrf.mxu0
        %1287 = vmatprep.mubr.bf16.mxu0 0
        %1288 = vmatmul.mubr.bf16.gmra.mxu0 %v1141
        %v1289 = vpop.f32.mrf.mxu0
        %v1290 = vadd.f32 0.0, %v1289
        %v1291 = vpop.f32.mrf.mxu0
        %v1292 = vpop.f32.mrf.mxu0
        %v1293 = vadd.f32 0.0, %v1292
        %v1294 = vpop.f32.mrf.mxu0
        %1295 = vmatprep.mubr.bf16.mxu0 0
        %1296 = vmatmul.mubr.bf16.gmra.mxu0 %v1142
        %v1297 = vpop.f32.mrf.mxu0
        %v1298 = vadd.f32 0.0, %v1297
        %v1299 = vpop.f32.mrf.mxu0
        %v1300 = vpop.f32.mrf.mxu0
        %v1301 = vadd.f32 0.0, %v1300
        %v1302 = vpop.f32.mrf.mxu0
        %1303 = vdwg.mxu0
        %v1304 = vadd.f32 %v1103, %v1242
        %v1305 = vadd.f32 %v1104, %v1245
        %v1306 = vadd.f32 %v1105, %v1250
        %v1307 = vadd.f32 %v1106, %v1253
        %v1308 = vadd.f32 %v1107, %v1258
        %v1309 = vadd.f32 %v1108, %v1261
        %v1310 = vadd.f32 %v1109, %v1266
        %v1311 = vadd.f32 %v1110, %v1269
        %v1312 = vadd.f32 %v1111, %v1274
        %v1313 = vadd.f32 %v1112, %v1277
        %v1314 = vadd.f32 %v1113, %v1282
        %v1315 = vadd.f32 %v1114, %v1285
        %v1316 = vadd.f32 %v1115, %v1290
        %v1317 = vadd.f32 %v1116, %v1293
        %v1318 = vadd.f32 %v1117, %v1298
        %v1319 = vadd.f32 %v1118, %v1301
        %v1320 = vld [vmem:[%s917 + $0x2] sm:$0xff]
        %v1321 = vld [vmem:[%s917 + $0x12] sm:$0xff]
        %v1322 = vld [vmem:[%s917 + $0x22] sm:$0xff]
        %v1323 = vld [vmem:[%s917 + $0x32] sm:$0xff]
        %v1324 = vld [vmem:[%s917 + $0x42] sm:$0xff]
        %v1325 = vld [vmem:[%s917 + $0x52] sm:$0xff]
        %v1326 = vld [vmem:[%s917 + $0x62] sm:$0xff]
        %v1327 = vld [vmem:[%s917 + $0x72] sm:$0xff]
        %v1328 = vld [vmem:[%s917 + $0xa2] sm:$0xff]
        %v1329 = vld [vmem:[%s917 + $0xb2] sm:$0xff]
        %v1330 = vld [vmem:[%s917 + $0xc2] sm:$0xff]
        %v1331 = vld [vmem:[%s917 + $0xd2] sm:$0xff]
        %v1332 = vld [vmem:[%s917 + $0xe2] sm:$0xff]
        %v1333 = vld [vmem:[%s917 + $0xf2] sm:$0xff]
        %v1334 = vld [vmem:[%s917 + $0x102] sm:$0xff]
        %v1335 = vld [vmem:[%s917 + $0x112] sm:$0xff]
        %v1336 = vpack.c.bf16 %v1321, %v1320
        %v1337 = vpack.c.bf16 %v1323, %v1322
        %v1338 = vpack.c.bf16 %v1325, %v1324
        %v1339 = vpack.c.bf16 %v1327, %v1326
        %v1340 = vpack.c.bf16 %v1329, %v1328
        %v1341 = vpack.c.bf16 %v1331, %v1330
        %v1342 = vpack.c.bf16 %v1333, %v1332
        %v1343 = vpack.c.bf16 %v1335, %v1334
        %v1344 = vld [vmem:[%s205 + $0x140] sm:$0xf]
        %v1345 = vld [vmem:[%s205 + $0x144] sm:$0xf]
        %v1346 = vld [vmem:[%s205 + $0x148] sm:$0xf]
        %v1347 = vld [vmem:[%s205 + $0x14c] sm:$0xf]
        %v1348 = vld [vmem:[%s205 + $0x150] sm:$0xf]
        %v1349 = vld [vmem:[%s205 + $0x154] sm:$0xf]
        %v1350 = vld [vmem:[%s205 + $0x158] sm:$0xf]
        %v1351 = vld [vmem:[%s205 + $0x15c] sm:$0xf]
        %v1352 = vld [vmem:[%s205 + $0x160] sm:$0xf]
        %v1353 = vld [vmem:[%s205 + $0x164] sm:$0xf]
        %v1354 = vld [vmem:[%s205 + $0x168] sm:$0xf]
        %v1355 = vld [vmem:[%s205 + $0x16c] sm:$0xf]
        %v1356 = vld [vmem:[%s205 + $0x170] sm:$0xf]
        %v1357 = vld [vmem:[%s205 + $0x174] sm:$0xf]
        %v1358 = vld [vmem:[%s205 + $0x178] sm:$0xf]
        %v1359 = vld [vmem:[%s205 + $0x17c] sm:$0xf]
        %v1376 = vunpack.c.l.b16 %v1344
        %v1377 = vunpack.c.l.b16 %v1345
        %v1378 = vunpack.c.l.b16 %v1346
        %v1379 = vunpack.c.l.b16 %v1347
        %v1380 = vunpack.c.l.b16 %v1348
        %v1381 = vunpack.c.l.b16 %v1349
        %v1382 = vunpack.c.l.b16 %v1350
        %v1383 = vunpack.c.l.b16 %v1351
        %v1384 = vunpack.c.l.b16 %v1352
        %v1385 = vunpack.c.l.b16 %v1353
        %v1386 = vunpack.c.l.b16 %v1354
        %v1387 = vunpack.c.l.b16 %v1355
        %v1388 = vunpack.c.l.b16 %v1356
        %v1389 = vunpack.c.l.b16 %v1357
        %v1390 = vunpack.c.l.b16 %v1358
        %v1391 = vunpack.c.l.b16 %v1359
        %v1392 = vpack.c.b16 %v1377, %v1376
        %v1393 = vpack.c.b16 %v1379, %v1378
        %v1394 = vpack.c.b16 %v1381, %v1380
        %v1395 = vpack.c.b16 %v1383, %v1382
        %v1396 = vpack.c.b16 %v1385, %v1384
        %v1397 = vpack.c.b16 %v1387, %v1386
        %v1398 = vpack.c.b16 %v1389, %v1388
        %v1399 = vpack.c.b16 %v1391, %v1390
        %1408 = vmatprep.subr.bf16.mxu0 0
        %1409 = vmatpush1.bf16.msra.mxu0 %v1399
        %1410 = vmatprep.subr.bf16.mxu0 0
        %1411 = vmatpush1.bf16.msra.mxu0 %v1398
        %1412 = vmatprep.subr.bf16.mxu0 0
        %1413 = vmatpush1.bf16.msra.mxu0 %v1397
        %1414 = vmatprep.subr.bf16.mxu0 0
        %1415 = vmatpush1.bf16.msra.mxu0 %v1396
        %1416 = vmatprep.subr.bf16.mxu0 0
        %1417 = vmatpush1.bf16.msra.mxu0 %v1395
        %1418 = vmatprep.subr.bf16.mxu0 0
        %1419 = vmatpush1.bf16.msra.mxu0 %v1394
        %1420 = vmatprep.subr.bf16.mxu0 0
        %1421 = vmatpush1.bf16.msra.mxu0 %v1393
        %1422 = vmatprep.subr.bf16.mxu0 0
        %1423 = vmatpush1.bf16.msra.mxu0 %v1392
        %1424 = vmatprep.subr.bf16.mxu0 0
        %1425 = vmatpush2.bf16.msra.mxu0 0
        %1426 = vmatprep.subr.bf16.mxu0 0
        %1427 = vmatpush2.bf16.msra.mxu0 0
        %1428 = vmatprep.subr.bf16.mxu0 0
        %1429 = vmatpush2.bf16.msra.mxu0 0
        %1430 = vmatprep.subr.bf16.mxu0 0
        %1431 = vmatpush2.bf16.msra.mxu0 0
        %1432 = vmatprep.subr.bf16.mxu0 0
        %1433 = vmatpush2.bf16.msra.mxu0 0
        %1434 = vmatprep.subr.bf16.mxu0 0
        %1435 = vmatpush2.bf16.msra.mxu0 0
        %1436 = vmatprep.subr.bf16.mxu0 0
        %1437 = vmatpush2.bf16.msra.mxu0 0
        %1438 = vmatprep.subr.bf16.mxu0 0
        %1439 = vmatpush2.bf16.msra.mxu0 0
        %1440 = vmatprep.mubr.bf16.mxu0 0
        %1441 = vmatmul.mubr.bf16.gmra.mxu0 %v1336
        %v1442 = vpop.f32.mrf.mxu0
        %v1443 = vadd.f32 0.0, %v1442
        %v1444 = vpop.f32.mrf.mxu0
        %v1445 = vpop.f32.mrf.mxu0
        %v1446 = vadd.f32 0.0, %v1445
        %v1447 = vpop.f32.mrf.mxu0
        %1448 = vmatprep.mubr.bf16.mxu0 0
        %1449 = vmatmul.mubr.bf16.gmra.mxu0 %v1337
        %v1450 = vpop.f32.mrf.mxu0
        %v1451 = vadd.f32 0.0, %v1450
        %v1452 = vpop.f32.mrf.mxu0
        %v1453 = vpop.f32.mrf.mxu0
        %v1454 = vadd.f32 0.0, %v1453
        %v1455 = vpop.f32.mrf.mxu0
        %1456 = vmatprep.mubr.bf16.mxu0 0
        %1457 = vmatmul.mubr.bf16.gmra.mxu0 %v1338
        %v1458 = vpop.f32.mrf.mxu0
        %v1459 = vadd.f32 0.0, %v1458
        %v1460 = vpop.f32.mrf.mxu0
        %v1461 = vpop.f32.mrf.mxu0
        %v1462 = vadd.f32 0.0, %v1461
        %v1463 = vpop.f32.mrf.mxu0
        %1464 = vmatprep.mubr.bf16.mxu0 0
        %1465 = vmatmul.mubr.bf16.gmra.mxu0 %v1339
        %v1466 = vpop.f32.mrf.mxu0
        %v1467 = vadd.f32 0.0, %v1466
        %v1468 = vpop.f32.mrf.mxu0
        %v1469 = vpop.f32.mrf.mxu0
        %v1470 = vadd.f32 0.0, %v1469
        %v1471 = vpop.f32.mrf.mxu0
        %1472 = vmatprep.mubr.bf16.mxu0 0
        %1473 = vmatmul.mubr.bf16.gmra.mxu0 %v1340
        %v1474 = vpop.f32.mrf.mxu0
        %v1475 = vadd.f32 0.0, %v1474
        %v1476 = vpop.f32.mrf.mxu0
        %v1477 = vpop.f32.mrf.mxu0
        %v1478 = vadd.f32 0.0, %v1477
        %v1479 = vpop.f32.mrf.mxu0
        %1480 = vmatprep.mubr.bf16.mxu0 0
        %1481 = vmatmul.mubr.bf16.gmra.mxu0 %v1341
        %v1482 = vpop.f32.mrf.mxu0
        %v1483 = vadd.f32 0.0, %v1482
        %v1484 = vpop.f32.mrf.mxu0
        %v1485 = vpop.f32.mrf.mxu0
        %v1486 = vadd.f32 0.0, %v1485
        %v1487 = vpop.f32.mrf.mxu0
        %1488 = vmatprep.mubr.bf16.mxu0 0
        %1489 = vmatmul.mubr.bf16.gmra.mxu0 %v1342
        %v1490 = vpop.f32.mrf.mxu0
        %v1491 = vadd.f32 0.0, %v1490
        %v1492 = vpop.f32.mrf.mxu0
        %v1493 = vpop.f32.mrf.mxu0
        %v1494 = vadd.f32 0.0, %v1493
        %v1495 = vpop.f32.mrf.mxu0
        %1496 = vmatprep.mubr.bf16.mxu0 0
        %1497 = vmatmul.mubr.bf16.gmra.mxu0 %v1343
        %v1498 = vpop.f32.mrf.mxu0
        %v1499 = vadd.f32 0.0, %v1498
        %v1500 = vpop.f32.mrf.mxu0
        %v1501 = vpop.f32.mrf.mxu0
        %v1502 = vadd.f32 0.0, %v1501
        %v1503 = vpop.f32.mrf.mxu0
        %1504 = vdwg.mxu0
        %v1505 = vadd.f32 %v1304, %v1443
        %v1506 = vadd.f32 %v1305, %v1446
        %v1507 = vadd.f32 %v1306, %v1451
        %v1508 = vadd.f32 %v1307, %v1454
        %v1509 = vadd.f32 %v1308, %v1459
        %v1510 = vadd.f32 %v1309, %v1462
        %v1511 = vadd.f32 %v1310, %v1467
        %v1512 = vadd.f32 %v1311, %v1470
        %v1513 = vadd.f32 %v1312, %v1475
        %v1514 = vadd.f32 %v1313, %v1478
        %v1515 = vadd.f32 %v1314, %v1483
        %v1516 = vadd.f32 %v1315, %v1486
        %v1517 = vadd.f32 %v1316, %v1491
        %v1518 = vadd.f32 %v1317, %v1494
        %v1519 = vadd.f32 %v1318, %v1499
        %v1520 = vadd.f32 %v1319, %v1502
        %s1521 = sadd.s32 32, %s343
        %s1522 = scalar_lea.vmem [#allocation2], %s1521
        %v1523 = vld [vmem:[%s1522] sm:$0xff]
        %v1524 = vld [vmem:[%s1522 + $0x10] sm:$0xff]
        %v1525 = vld [vmem:[%s1522 + $0x20] sm:$0xff]
        %v1526 = vld [vmem:[%s1522 + $0x30] sm:$0xff]
        %v1527 = vld [vmem:[%s1522 + $0x40] sm:$0xff]
        %v1528 = vld [vmem:[%s1522 + $0x50] sm:$0xff]
        %v1529 = vld [vmem:[%s1522 + $0x60] sm:$0xff]
        %v1530 = vld [vmem:[%s1522 + $0x70] sm:$0xff]
        %v1531 = vld [vmem:[%s1522 + $0xa0] sm:$0xff]
        %v1532 = vld [vmem:[%s1522 + $0xb0] sm:$0xff]
        %v1533 = vld [vmem:[%s1522 + $0xc0] sm:$0xff]
        %v1534 = vld [vmem:[%s1522 + $0xd0] sm:$0xff]
        %v1535 = vld [vmem:[%s1522 + $0xe0] sm:$0xff]
        %v1536 = vld [vmem:[%s1522 + $0xf0] sm:$0xff]
        %v1537 = vld [vmem:[%s1522 + $0x100] sm:$0xff]
        %v1538 = vld [vmem:[%s1522 + $0x110] sm:$0xff]
        %v1539 = vpack.c.bf16 %v1524, %v1523
        %v1540 = vpack.c.bf16 %v1526, %v1525
        %v1541 = vpack.c.bf16 %v1528, %v1527
        %v1542 = vpack.c.bf16 %v1530, %v1529
        %v1543 = vpack.c.bf16 %v1532, %v1531
        %v1544 = vpack.c.bf16 %v1534, %v1533
        %v1545 = vpack.c.bf16 %v1536, %v1535
        %v1546 = vpack.c.bf16 %v1538, %v1537
        %v1547 = vld [vmem:[%s205 + $0x180] sm:$0xf]
        %v1548 = vld [vmem:[%s205 + $0x184] sm:$0xf]
        %v1549 = vld [vmem:[%s205 + $0x188] sm:$0xf]
        %v1550 = vld [vmem:[%s205 + $0x18c] sm:$0xf]
        %v1551 = vld [vmem:[%s205 + $0x190] sm:$0xf]
        %v1552 = vld [vmem:[%s205 + $0x194] sm:$0xf]
        %v1553 = vld [vmem:[%s205 + $0x198] sm:$0xf]
        %v1554 = vld [vmem:[%s205 + $0x19c] sm:$0xf]
        %v1555 = vld [vmem:[%s205 + $0x1a0] sm:$0xf]
        %v1556 = vld [vmem:[%s205 + $0x1a4] sm:$0xf]
        %v1557 = vld [vmem:[%s205 + $0x1a8] sm:$0xf]
        %v1558 = vld [vmem:[%s205 + $0x1ac] sm:$0xf]
        %v1559 = vld [vmem:[%s205 + $0x1b0] sm:$0xf]
        %v1560 = vld [vmem:[%s205 + $0x1b4] sm:$0xf]
        %v1561 = vld [vmem:[%s205 + $0x1b8] sm:$0xf]
        %v1562 = vld [vmem:[%s205 + $0x1bc] sm:$0xf]
        %v1579 = vunpack.c.l.b16 %v1547
        %v1580 = vunpack.c.l.b16 %v1548
        %v1581 = vunpack.c.l.b16 %v1549
        %v1582 = vunpack.c.l.b16 %v1550
        %v1583 = vunpack.c.l.b16 %v1551
        %v1584 = vunpack.c.l.b16 %v1552
        %v1585 = vunpack.c.l.b16 %v1553
        %v1586 = vunpack.c.l.b16 %v1554
        %v1587 = vunpack.c.l.b16 %v1555
        %v1588 = vunpack.c.l.b16 %v1556
        %v1589 = vunpack.c.l.b16 %v1557
        %v1590 = vunpack.c.l.b16 %v1558
        %v1591 = vunpack.c.l.b16 %v1559
        %v1592 = vunpack.c.l.b16 %v1560
        %v1593 = vunpack.c.l.b16 %v1561
        %v1594 = vunpack.c.l.b16 %v1562
        %v1595 = vpack.c.b16 %v1580, %v1579
        %v1596 = vpack.c.b16 %v1582, %v1581
        %v1597 = vpack.c.b16 %v1584, %v1583
        %v1598 = vpack.c.b16 %v1586, %v1585
        %v1599 = vpack.c.b16 %v1588, %v1587
        %v1600 = vpack.c.b16 %v1590, %v1589
        %v1601 = vpack.c.b16 %v1592, %v1591
        %v1602 = vpack.c.b16 %v1594, %v1593
        %1611 = vmatprep.subr.bf16.mxu0 0
        %1612 = vmatpush1.bf16.msra.mxu0 %v1602
        %1613 = vmatprep.subr.bf16.mxu0 0
        %1614 = vmatpush1.bf16.msra.mxu0 %v1601
        %1615 = vmatprep.subr.bf16.mxu0 0
        %1616 = vmatpush1.bf16.msra.mxu0 %v1600
        %1617 = vmatprep.subr.bf16.mxu0 0
        %1618 = vmatpush1.bf16.msra.mxu0 %v1599
        %1619 = vmatprep.subr.bf16.mxu0 0
        %1620 = vmatpush1.bf16.msra.mxu0 %v1598
        %1621 = vmatprep.subr.bf16.mxu0 0
        %1622 = vmatpush1.bf16.msra.mxu0 %v1597
        %1623 = vmatprep.subr.bf16.mxu0 0
        %1624 = vmatpush1.bf16.msra.mxu0 %v1596
        %1625 = vmatprep.subr.bf16.mxu0 0
        %1626 = vmatpush1.bf16.msra.mxu0 %v1595
        %1627 = vmatprep.subr.bf16.mxu0 0
        %1628 = vmatpush2.bf16.msra.mxu0 0
        %1629 = vmatprep.subr.bf16.mxu0 0
        %1630 = vmatpush2.bf16.msra.mxu0 0
        %1631 = vmatprep.subr.bf16.mxu0 0
        %1632 = vmatpush2.bf16.msra.mxu0 0
        %1633 = vmatprep.subr.bf16.mxu0 0
        %1634 = vmatpush2.bf16.msra.mxu0 0
        %1635 = vmatprep.subr.bf16.mxu0 0
        %1636 = vmatpush2.bf16.msra.mxu0 0
        %1637 = vmatprep.subr.bf16.mxu0 0
        %1638 = vmatpush2.bf16.msra.mxu0 0
        %1639 = vmatprep.subr.bf16.mxu0 0
        %1640 = vmatpush2.bf16.msra.mxu0 0
        %1641 = vmatprep.subr.bf16.mxu0 0
        %1642 = vmatpush2.bf16.msra.mxu0 0
        %1643 = vmatprep.mubr.bf16.mxu0 0
        %1644 = vmatmul.mubr.bf16.gmra.mxu0 %v1539
        %v1645 = vpop.f32.mrf.mxu0
        %v1646 = vadd.f32 0.0, %v1645
        %v1647 = vpop.f32.mrf.mxu0
        %v1648 = vpop.f32.mrf.mxu0
        %v1649 = vadd.f32 0.0, %v1648
        %v1650 = vpop.f32.mrf.mxu0
        %1651 = vmatprep.mubr.bf16.mxu0 0
        %1652 = vmatmul.mubr.bf16.gmra.mxu0 %v1540
        %v1653 = vpop.f32.mrf.mxu0
        %v1654 = vadd.f32 0.0, %v1653
        %v1655 = vpop.f32.mrf.mxu0
        %v1656 = vpop.f32.mrf.mxu0
        %v1657 = vadd.f32 0.0, %v1656
        %v1658 = vpop.f32.mrf.mxu0
        %1659 = vmatprep.mubr.bf16.mxu0 0
        %1660 = vmatmul.mubr.bf16.gmra.mxu0 %v1541
        %v1661 = vpop.f32.mrf.mxu0
        %v1662 = vadd.f32 0.0, %v1661
        %v1663 = vpop.f32.mrf.mxu0
        %v1664 = vpop.f32.mrf.mxu0
        %v1665 = vadd.f32 0.0, %v1664
        %v1666 = vpop.f32.mrf.mxu0
        %1667 = vmatprep.mubr.bf16.mxu0 0
        %1668 = vmatmul.mubr.bf16.gmra.mxu0 %v1542
        %v1669 = vpop.f32.mrf.mxu0
        %v1670 = vadd.f32 0.0, %v1669
        %v1671 = vpop.f32.mrf.mxu0
        %v1672 = vpop.f32.mrf.mxu0
        %v1673 = vadd.f32 0.0, %v1672
        %v1674 = vpop.f32.mrf.mxu0
        %1675 = vmatprep.mubr.bf16.mxu0 0
        %1676 = vmatmul.mubr.bf16.gmra.mxu0 %v1543
        %v1677 = vpop.f32.mrf.mxu0
        %v1678 = vadd.f32 0.0, %v1677
        %v1679 = vpop.f32.mrf.mxu0
        %v1680 = vpop.f32.mrf.mxu0
        %v1681 = vadd.f32 0.0, %v1680
        %v1682 = vpop.f32.mrf.mxu0
        %1683 = vmatprep.mubr.bf16.mxu0 0
        %1684 = vmatmul.mubr.bf16.gmra.mxu0 %v1544
        %v1685 = vpop.f32.mrf.mxu0
        %v1686 = vadd.f32 0.0, %v1685
        %v1687 = vpop.f32.mrf.mxu0
        %v1688 = vpop.f32.mrf.mxu0
        %v1689 = vadd.f32 0.0, %v1688
        %v1690 = vpop.f32.mrf.mxu0
        %1691 = vmatprep.mubr.bf16.mxu0 0
        %1692 = vmatmul.mubr.bf16.gmra.mxu0 %v1545
        %v1693 = vpop.f32.mrf.mxu0
        %v1694 = vadd.f32 0.0, %v1693
        %v1695 = vpop.f32.mrf.mxu0
        %v1696 = vpop.f32.mrf.mxu0
        %v1697 = vadd.f32 0.0, %v1696
        %v1698 = vpop.f32.mrf.mxu0
        %1699 = vmatprep.mubr.bf16.mxu0 0
        %1700 = vmatmul.mubr.bf16.gmra.mxu0 %v1546
        %v1701 = vpop.f32.mrf.mxu0
        %v1702 = vadd.f32 0.0, %v1701
        %v1703 = vpop.f32.mrf.mxu0
        %v1704 = vpop.f32.mrf.mxu0
        %v1705 = vadd.f32 0.0, %v1704
        %v1706 = vpop.f32.mrf.mxu0
        %1707 = vdwg.mxu0
        %v1708 = vadd.f32 %v1505, %v1646
        %v1709 = vadd.f32 %v1506, %v1649
        %v1710 = vadd.f32 %v1507, %v1654
        %v1711 = vadd.f32 %v1508, %v1657
        %v1712 = vadd.f32 %v1509, %v1662
        %v1713 = vadd.f32 %v1510, %v1665
        %v1714 = vadd.f32 %v1511, %v1670
        %v1715 = vadd.f32 %v1512, %v1673
        %v1716 = vadd.f32 %v1513, %v1678
        %v1717 = vadd.f32 %v1514, %v1681
        %v1718 = vadd.f32 %v1515, %v1686
        %v1719 = vadd.f32 %v1516, %v1689
        %v1720 = vadd.f32 %v1517, %v1694
        %v1721 = vadd.f32 %v1518, %v1697
        %v1722 = vadd.f32 %v1519, %v1702
        %v1723 = vadd.f32 %v1520, %v1705
        %v1724 = vld [vmem:[%s1522 + $0x1] sm:$0xff]
        %v1725 = vld [vmem:[%s1522 + $0x11] sm:$0xff]
        %v1726 = vld [vmem:[%s1522 + $0x21] sm:$0xff]
        %v1727 = vld [vmem:[%s1522 + $0x31] sm:$0xff]
        %v1728 = vld [vmem:[%s1522 + $0x41] sm:$0xff]
        %v1729 = vld [vmem:[%s1522 + $0x51] sm:$0xff]
        %v1730 = vld [vmem:[%s1522 + $0x61] sm:$0xff]
        %v1731 = vld [vmem:[%s1522 + $0x71] sm:$0xff]
        %v1732 = vld [vmem:[%s1522 + $0xa1] sm:$0xff]
        %v1733 = vld [vmem:[%s1522 + $0xb1] sm:$0xff]
        %v1734 = vld [vmem:[%s1522 + $0xc1] sm:$0xff]
        %v1735 = vld [vmem:[%s1522 + $0xd1] sm:$0xff]
        %v1736 = vld [vmem:[%s1522 + $0xe1] sm:$0xff]
        %v1737 = vld [vmem:[%s1522 + $0xf1] sm:$0xff]
        %v1738 = vld [vmem:[%s1522 + $0x101] sm:$0xff]
        %v1739 = vld [vmem:[%s1522 + $0x111] sm:$0xff]
        %v1740 = vpack.c.bf16 %v1725, %v1724
        %v1741 = vpack.c.bf16 %v1727, %v1726
        %v1742 = vpack.c.bf16 %v1729, %v1728
        %v1743 = vpack.c.bf16 %v1731, %v1730
        %v1744 = vpack.c.bf16 %v1733, %v1732
        %v1745 = vpack.c.bf16 %v1735, %v1734
        %v1746 = vpack.c.bf16 %v1737, %v1736
        %v1747 = vpack.c.bf16 %v1739, %v1738
        %v1748 = vld [vmem:[%s205 + $0x1c0] sm:$0xf]
        %v1749 = vld [vmem:[%s205 + $0x1c4] sm:$0xf]
        %v1750 = vld [vmem:[%s205 + $0x1c8] sm:$0xf]
        %v1751 = vld [vmem:[%s205 + $0x1cc] sm:$0xf]
        %v1752 = vld [vmem:[%s205 + $0x1d0] sm:$0xf]
        %v1753 = vld [vmem:[%s205 + $0x1d4] sm:$0xf]
        %v1754 = vld [vmem:[%s205 + $0x1d8] sm:$0xf]
        %v1755 = vld [vmem:[%s205 + $0x1dc] sm:$0xf]
        %v1756 = vld [vmem:[%s205 + $0x1e0] sm:$0xf]
        %v1757 = vld [vmem:[%s205 + $0x1e4] sm:$0xf]
        %v1758 = vld [vmem:[%s205 + $0x1e8] sm:$0xf]
        %v1759 = vld [vmem:[%s205 + $0x1ec] sm:$0xf]
        %v1760 = vld [vmem:[%s205 + $0x1f0] sm:$0xf]
        %v1761 = vld [vmem:[%s205 + $0x1f4] sm:$0xf]
        %v1762 = vld [vmem:[%s205 + $0x1f8] sm:$0xf]
        %v1763 = vld [vmem:[%s205 + $0x1fc] sm:$0xf]
        %v1780 = vunpack.c.l.b16 %v1748
        %v1781 = vunpack.c.l.b16 %v1749
        %v1782 = vunpack.c.l.b16 %v1750
        %v1783 = vunpack.c.l.b16 %v1751
        %v1784 = vunpack.c.l.b16 %v1752
        %v1785 = vunpack.c.l.b16 %v1753
        %v1786 = vunpack.c.l.b16 %v1754
        %v1787 = vunpack.c.l.b16 %v1755
        %v1788 = vunpack.c.l.b16 %v1756
        %v1789 = vunpack.c.l.b16 %v1757
        %v1790 = vunpack.c.l.b16 %v1758
        %v1791 = vunpack.c.l.b16 %v1759
        %v1792 = vunpack.c.l.b16 %v1760
        %v1793 = vunpack.c.l.b16 %v1761
        %v1794 = vunpack.c.l.b16 %v1762
        %v1795 = vunpack.c.l.b16 %v1763
        %v1796 = vpack.c.b16 %v1781, %v1780
        %v1797 = vpack.c.b16 %v1783, %v1782
        %v1798 = vpack.c.b16 %v1785, %v1784
        %v1799 = vpack.c.b16 %v1787, %v1786
        %v1800 = vpack.c.b16 %v1789, %v1788
        %v1801 = vpack.c.b16 %v1791, %v1790
        %v1802 = vpack.c.b16 %v1793, %v1792
        %v1803 = vpack.c.b16 %v1795, %v1794
        %1812 = vmatprep.subr.bf16.mxu0 0
        %1813 = vmatpush1.bf16.msra.mxu0 %v1803
        %1814 = vmatprep.subr.bf16.mxu0 0
        %1815 = vmatpush1.bf16.msra.mxu0 %v1802
        %1816 = vmatprep.subr.bf16.mxu0 0
        %1817 = vmatpush1.bf16.msra.mxu0 %v1801
        %1818 = vmatprep.subr.bf16.mxu0 0
        %1819 = vmatpush1.bf16.msra.mxu0 %v1800
        %1820 = vmatprep.subr.bf16.mxu0 0
        %1821 = vmatpush1.bf16.msra.mxu0 %v1799
        %1822 = vmatprep.subr.bf16.mxu0 0
        %1823 = vmatpush1.bf16.msra.mxu0 %v1798
        %1824 = vmatprep.subr.bf16.mxu0 0
        %1825 = vmatpush1.bf16.msra.mxu0 %v1797
        %1826 = vmatprep.subr.bf16.mxu0 0
        %1827 = vmatpush1.bf16.msra.mxu0 %v1796
        %1828 = vmatprep.subr.bf16.mxu0 0
        %1829 = vmatpush2.bf16.msra.mxu0 0
        %1830 = vmatprep.subr.bf16.mxu0 0
        %1831 = vmatpush2.bf16.msra.mxu0 0
        %1832 = vmatprep.subr.bf16.mxu0 0
        %1833 = vmatpush2.bf16.msra.mxu0 0
        %1834 = vmatprep.subr.bf16.mxu0 0
        %1835 = vmatpush2.bf16.msra.mxu0 0
        %1836 = vmatprep.subr.bf16.mxu0 0
        %1837 = vmatpush2.bf16.msra.mxu0 0
        %1838 = vmatprep.subr.bf16.mxu0 0
        %1839 = vmatpush2.bf16.msra.mxu0 0
        %1840 = vmatprep.subr.bf16.mxu0 0
        %1841 = vmatpush2.bf16.msra.mxu0 0
        %1842 = vmatprep.subr.bf16.mxu0 0
        %1843 = vmatpush2.bf16.msra.mxu0 0
        %1844 = vmatprep.mubr.bf16.mxu0 0
        %1845 = vmatmul.mubr.bf16.gmra.mxu0 %v1740
        %v1846 = vpop.f32.mrf.mxu0
        %v1847 = vadd.f32 0.0, %v1846
        %v1848 = vpop.f32.mrf.mxu0
        %v1849 = vpop.f32.mrf.mxu0
        %v1850 = vadd.f32 0.0, %v1849
        %v1851 = vpop.f32.mrf.mxu0
        %1852 = vmatprep.mubr.bf16.mxu0 0
        %1853 = vmatmul.mubr.bf16.gmra.mxu0 %v1741
        %v1854 = vpop.f32.mrf.mxu0
        %v1855 = vadd.f32 0.0, %v1854
        %v1856 = vpop.f32.mrf.mxu0
        %v1857 = vpop.f32.mrf.mxu0
        %v1858 = vadd.f32 0.0, %v1857
        %v1859 = vpop.f32.mrf.mxu0
        %1860 = vmatprep.mubr.bf16.mxu0 0
        %1861 = vmatmul.mubr.bf16.gmra.mxu0 %v1742
        %v1862 = vpop.f32.mrf.mxu0
        %v1863 = vadd.f32 0.0, %v1862
        %v1864 = vpop.f32.mrf.mxu0
        %v1865 = vpop.f32.mrf.mxu0
        %v1866 = vadd.f32 0.0, %v1865
        %v1867 = vpop.f32.mrf.mxu0
        %1868 = vmatprep.mubr.bf16.mxu0 0
        %1869 = vmatmul.mubr.bf16.gmra.mxu0 %v1743
        %v1870 = vpop.f32.mrf.mxu0
        %v1871 = vadd.f32 0.0, %v1870
        %v1872 = vpop.f32.mrf.mxu0
        %v1873 = vpop.f32.mrf.mxu0
        %v1874 = vadd.f32 0.0, %v1873
        %v1875 = vpop.f32.mrf.mxu0
        %1876 = vmatprep.mubr.bf16.mxu0 0
        %1877 = vmatmul.mubr.bf16.gmra.mxu0 %v1744
        %v1878 = vpop.f32.mrf.mxu0
        %v1879 = vadd.f32 0.0, %v1878
        %v1880 = vpop.f32.mrf.mxu0
        %v1881 = vpop.f32.mrf.mxu0
        %v1882 = vadd.f32 0.0, %v1881
        %v1883 = vpop.f32.mrf.mxu0
        %1884 = vmatprep.mubr.bf16.mxu0 0
        %1885 = vmatmul.mubr.bf16.gmra.mxu0 %v1745
        %v1886 = vpop.f32.mrf.mxu0
        %v1887 = vadd.f32 0.0, %v1886
        %v1888 = vpop.f32.mrf.mxu0
        %v1889 = vpop.f32.mrf.mxu0
        %v1890 = vadd.f32 0.0, %v1889
        %v1891 = vpop.f32.mrf.mxu0
        %1892 = vmatprep.mubr.bf16.mxu0 0
        %1893 = vmatmul.mubr.bf16.gmra.mxu0 %v1746
        %v1894 = vpop.f32.mrf.mxu0
        %v1895 = vadd.f32 0.0, %v1894
        %v1896 = vpop.f32.mrf.mxu0
        %v1897 = vpop.f32.mrf.mxu0
        %v1898 = vadd.f32 0.0, %v1897
        %v1899 = vpop.f32.mrf.mxu0
        %1900 = vmatprep.mubr.bf16.mxu0 0
        %1901 = vmatmul.mubr.bf16.gmra.mxu0 %v1747
        %v1902 = vpop.f32.mrf.mxu0
        %v1903 = vadd.f32 0.0, %v1902
        %v1904 = vpop.f32.mrf.mxu0
        %v1905 = vpop.f32.mrf.mxu0
        %v1906 = vadd.f32 0.0, %v1905
        %v1907 = vpop.f32.mrf.mxu0
        %1908 = vdwg.mxu0
        %v1909 = vadd.f32 %v1708, %v1847
        %v1910 = vadd.f32 %v1709, %v1850
        %v1911 = vadd.f32 %v1710, %v1855
        %v1912 = vadd.f32 %v1711, %v1858
        %v1913 = vadd.f32 %v1712, %v1863
        %v1914 = vadd.f32 %v1713, %v1866
        %v1915 = vadd.f32 %v1714, %v1871
        %v1916 = vadd.f32 %v1715, %v1874
        %v1917 = vadd.f32 %v1716, %v1879
        %v1918 = vadd.f32 %v1717, %v1882
        %v1919 = vadd.f32 %v1718, %v1887
        %v1920 = vadd.f32 %v1719, %v1890
        %v1921 = vadd.f32 %v1720, %v1895
        %v1922 = vadd.f32 %v1721, %v1898
        %v1923 = vadd.f32 %v1722, %v1903
        %v1924 = vadd.f32 %v1723, %v1906
        %v1925 = vld [vmem:[%s1522 + $0x2] sm:$0xff]
        %v1926 = vld [vmem:[%s1522 + $0x12] sm:$0xff]
        %v1927 = vld [vmem:[%s1522 + $0x22] sm:$0xff]
        %v1928 = vld [vmem:[%s1522 + $0x32] sm:$0xff]
        %v1929 = vld [vmem:[%s1522 + $0x42] sm:$0xff]
        %v1930 = vld [vmem:[%s1522 + $0x52] sm:$0xff]
        %v1931 = vld [vmem:[%s1522 + $0x62] sm:$0xff]
        %v1932 = vld [vmem:[%s1522 + $0x72] sm:$0xff]
        %v1933 = vld [vmem:[%s1522 + $0xa2] sm:$0xff]
        %v1934 = vld [vmem:[%s1522 + $0xb2] sm:$0xff]
        %v1935 = vld [vmem:[%s1522 + $0xc2] sm:$0xff]
        %v1936 = vld [vmem:[%s1522 + $0xd2] sm:$0xff]
        %v1937 = vld [vmem:[%s1522 + $0xe2] sm:$0xff]
        %v1938 = vld [vmem:[%s1522 + $0xf2] sm:$0xff]
        %v1939 = vld [vmem:[%s1522 + $0x102] sm:$0xff]
        %v1940 = vld [vmem:[%s1522 + $0x112] sm:$0xff]
        %v1941 = vpack.c.bf16 %v1926, %v1925
        %v1942 = vpack.c.bf16 %v1928, %v1927
        %v1943 = vpack.c.bf16 %v1930, %v1929
        %v1944 = vpack.c.bf16 %v1932, %v1931
        %v1945 = vpack.c.bf16 %v1934, %v1933
        %v1946 = vpack.c.bf16 %v1936, %v1935
        %v1947 = vpack.c.bf16 %v1938, %v1937
        %v1948 = vpack.c.bf16 %v1940, %v1939
        %v1949 = vld [vmem:[%s205 + $0x200] sm:$0xf]
        %v1950 = vld [vmem:[%s205 + $0x204] sm:$0xf]
        %v1951 = vld [vmem:[%s205 + $0x208] sm:$0xf]
        %v1952 = vld [vmem:[%s205 + $0x20c] sm:$0xf]
        %v1953 = vld [vmem:[%s205 + $0x210] sm:$0xf]
        %v1954 = vld [vmem:[%s205 + $0x214] sm:$0xf]
        %v1955 = vld [vmem:[%s205 + $0x218] sm:$0xf]
        %v1956 = vld [vmem:[%s205 + $0x21c] sm:$0xf]
        %v1957 = vld [vmem:[%s205 + $0x220] sm:$0xf]
        %v1958 = vld [vmem:[%s205 + $0x224] sm:$0xf]
        %v1959 = vld [vmem:[%s205 + $0x228] sm:$0xf]
        %v1960 = vld [vmem:[%s205 + $0x22c] sm:$0xf]
        %v1961 = vld [vmem:[%s205 + $0x230] sm:$0xf]
        %v1962 = vld [vmem:[%s205 + $0x234] sm:$0xf]
        %v1963 = vld [vmem:[%s205 + $0x238] sm:$0xf]
        %v1964 = vld [vmem:[%s205 + $0x23c] sm:$0xf]
        %v1981 = vunpack.c.l.b16 %v1949
        %v1982 = vunpack.c.l.b16 %v1950
        %v1983 = vunpack.c.l.b16 %v1951
        %v1984 = vunpack.c.l.b16 %v1952
        %v1985 = vunpack.c.l.b16 %v1953
        %v1986 = vunpack.c.l.b16 %v1954
        %v1987 = vunpack.c.l.b16 %v1955
        %v1988 = vunpack.c.l.b16 %v1956
        %v1989 = vunpack.c.l.b16 %v1957
        %v1990 = vunpack.c.l.b16 %v1958
        %v1991 = vunpack.c.l.b16 %v1959
        %v1992 = vunpack.c.l.b16 %v1960
        %v1993 = vunpack.c.l.b16 %v1961
        %v1994 = vunpack.c.l.b16 %v1962
        %v1995 = vunpack.c.l.b16 %v1963
        %v1996 = vunpack.c.l.b16 %v1964
        %v1997 = vpack.c.b16 %v1982, %v1981
        %v1998 = vpack.c.b16 %v1984, %v1983
        %v1999 = vpack.c.b16 %v1986, %v1985
        %v2000 = vpack.c.b16 %v1988, %v1987
        %v2001 = vpack.c.b16 %v1990, %v1989
        %v2002 = vpack.c.b16 %v1992, %v1991
        %v2003 = vpack.c.b16 %v1994, %v1993
        %v2004 = vpack.c.b16 %v1996, %v1995
        %2013 = vmatprep.subr.bf16.mxu0 0
        %2014 = vmatpush1.bf16.msra.mxu0 %v2004
        %2015 = vmatprep.subr.bf16.mxu0 0
        %2016 = vmatpush1.bf16.msra.mxu0 %v2003
        %2017 = vmatprep.subr.bf16.mxu0 0
        %2018 = vmatpush1.bf16.msra.mxu0 %v2002
        %2019 = vmatprep.subr.bf16.mxu0 0
        %2020 = vmatpush1.bf16.msra.mxu0 %v2001
        %2021 = vmatprep.subr.bf16.mxu0 0
        %2022 = vmatpush1.bf16.msra.mxu0 %v2000
        %2023 = vmatprep.subr.bf16.mxu0 0
        %2024 = vmatpush1.bf16.msra.mxu0 %v1999
        %2025 = vmatprep.subr.bf16.mxu0 0
        %2026 = vmatpush1.bf16.msra.mxu0 %v1998
        %2027 = vmatprep.subr.bf16.mxu0 0
        %2028 = vmatpush1.bf16.msra.mxu0 %v1997
        %2029 = vmatprep.subr.bf16.mxu0 0
        %2030 = vmatpush2.bf16.msra.mxu0 0
        %2031 = vmatprep.subr.bf16.mxu0 0
        %2032 = vmatpush2.bf16.msra.mxu0 0
        %2033 = vmatprep.subr.bf16.mxu0 0
        %2034 = vmatpush2.bf16.msra.mxu0 0
        %2035 = vmatprep.subr.bf16.mxu0 0
        %2036 = vmatpush2.bf16.msra.mxu0 0
        %2037 = vmatprep.subr.bf16.mxu0 0
        %2038 = vmatpush2.bf16.msra.mxu0 0
        %2039 = vmatprep.subr.bf16.mxu0 0
        %2040 = vmatpush2.bf16.msra.mxu0 0
        %2041 = vmatprep.subr.bf16.mxu0 0
        %2042 = vmatpush2.bf16.msra.mxu0 0
        %2043 = vmatprep.subr.bf16.mxu0 0
        %2044 = vmatpush2.bf16.msra.mxu0 0
        %2045 = vmatprep.mubr.bf16.mxu0 0
        %2046 = vmatmul.mubr.bf16.gmra.mxu0 %v1941
        %v2047 = vpop.f32.mrf.mxu0
        %v2048 = vadd.f32 0.0, %v2047
        %v2049 = vpop.f32.mrf.mxu0
        %v2050 = vpop.f32.mrf.mxu0
        %v2051 = vadd.f32 0.0, %v2050
        %v2052 = vpop.f32.mrf.mxu0
        %2053 = vmatprep.mubr.bf16.mxu0 0
        %2054 = vmatmul.mubr.bf16.gmra.mxu0 %v1942
        %v2055 = vpop.f32.mrf.mxu0
        %v2056 = vadd.f32 0.0, %v2055
        %v2057 = vpop.f32.mrf.mxu0
        %v2058 = vpop.f32.mrf.mxu0
        %v2059 = vadd.f32 0.0, %v2058
        %v2060 = vpop.f32.mrf.mxu0
        %2061 = vmatprep.mubr.bf16.mxu0 0
        %2062 = vmatmul.mubr.bf16.gmra.mxu0 %v1943
        %v2063 = vpop.f32.mrf.mxu0
        %v2064 = vadd.f32 0.0, %v2063
        %v2065 = vpop.f32.mrf.mxu0
        %v2066 = vpop.f32.mrf.mxu0
        %v2067 = vadd.f32 0.0, %v2066
        %v2068 = vpop.f32.mrf.mxu0
        %2069 = vmatprep.mubr.bf16.mxu0 0
        %2070 = vmatmul.mubr.bf16.gmra.mxu0 %v1944
        %v2071 = vpop.f32.mrf.mxu0
        %v2072 = vadd.f32 0.0, %v2071
        %v2073 = vpop.f32.mrf.mxu0
        %v2074 = vpop.f32.mrf.mxu0
        %v2075 = vadd.f32 0.0, %v2074
        %v2076 = vpop.f32.mrf.mxu0
        %2077 = vmatprep.mubr.bf16.mxu0 0
        %2078 = vmatmul.mubr.bf16.gmra.mxu0 %v1945
        %v2079 = vpop.f32.mrf.mxu0
        %v2080 = vadd.f32 0.0, %v2079
        %v2081 = vpop.f32.mrf.mxu0
        %v2082 = vpop.f32.mrf.mxu0
        %v2083 = vadd.f32 0.0, %v2082
        %v2084 = vpop.f32.mrf.mxu0
        %2085 = vmatprep.mubr.bf16.mxu0 0
        %2086 = vmatmul.mubr.bf16.gmra.mxu0 %v1946
        %v2087 = vpop.f32.mrf.mxu0
        %v2088 = vadd.f32 0.0, %v2087
        %v2089 = vpop.f32.mrf.mxu0
        %v2090 = vpop.f32.mrf.mxu0
        %v2091 = vadd.f32 0.0, %v2090
        %v2092 = vpop.f32.mrf.mxu0
        %2093 = vmatprep.mubr.bf16.mxu0 0
        %2094 = vmatmul.mubr.bf16.gmra.mxu0 %v1947
        %v2095 = vpop.f32.mrf.mxu0
        %v2096 = vadd.f32 0.0, %v2095
        %v2097 = vpop.f32.mrf.mxu0
        %v2098 = vpop.f32.mrf.mxu0
        %v2099 = vadd.f32 0.0, %v2098
        %v2100 = vpop.f32.mrf.mxu0
        %2101 = vmatprep.mubr.bf16.mxu0 0
        %2102 = vmatmul.mubr.bf16.gmra.mxu0 %v1948
        %v2103 = vpop.f32.mrf.mxu0
        %v2104 = vadd.f32 0.0, %v2103
        %v2105 = vpop.f32.mrf.mxu0
        %v2106 = vpop.f32.mrf.mxu0
        %v2107 = vadd.f32 0.0, %v2106
        %v2108 = vpop.f32.mrf.mxu0
        %2109 = vdwg.mxu0
        %v2110 = vadd.f32 %v1909, %v2048
        %v2111 = vadd.f32 %v1910, %v2051
        %v2112 = vadd.f32 %v1911, %v2056
        %v2113 = vadd.f32 %v1912, %v2059
        %v2114 = vadd.f32 %v1913, %v2064
        %v2115 = vadd.f32 %v1914, %v2067
        %v2116 = vadd.f32 %v1915, %v2072
        %v2117 = vadd.f32 %v1916, %v2075
        %v2118 = vadd.f32 %v1917, %v2080
        %v2119 = vadd.f32 %v1918, %v2083
        %v2120 = vadd.f32 %v1919, %v2088
        %v2121 = vadd.f32 %v1920, %v2091
        %v2122 = vadd.f32 %v1921, %v2096
        %v2123 = vadd.f32 %v1922, %v2099
        %v2124 = vadd.f32 %v1923, %v2104
        %v2125 = vadd.f32 %v1924, %v2107
        %v2126 = vadd.f32 %v2110, %v2111
        %v2127 = vadd.f32 %v2126, %v2112
        %v2128 = vadd.f32 %v2127, %v2113
        %v2129 = vadd.f32 %v2128, %v2114
        %v2130 = vadd.f32 %v2129, %v2115
        %v2131 = vadd.f32 %v2130, %v2116
        %v2132 = vadd.f32 %v2131, %v2117
        %v2133 = vadd.f32 %v2132, %v2118
        %v2134 = vadd.f32 %v2133, %v2119
        %v2135 = vadd.f32 %v2134, %v2120
        %v2136 = vadd.f32 %v2135, %v2121
        %v2137 = vadd.f32 %v2136, %v2122
        %v2138 = vadd.f32 %v2137, %v2123
        %v2139 = vadd.f32 %v2138, %v2124
        %v2140 = vadd.f32 %v2139, %v2125
        %v2141 = vrot.slane %v2140, 4
        %v2142 = vadd.f32 %v2140, %v2141
        %v2143 = vrot.slane %v2142, 2
        %v2144 = vadd.f32 %v2142, %v2143
        %v2145 = vrot.slane %v2144, 1
        %v2146 = vadd.f32 %v2144, %v2145
        %v2147 = vmul.f32 %v2110, %v2110
        %v2148 = vmul.f32 %v2111, %v2111
        %v2149 = vmul.f32 %v2112, %v2112
        %v2150 = vmul.f32 %v2113, %v2113
        %v2151 = vmul.f32 %v2114, %v2114
        %v2152 = vmul.f32 %v2115, %v2115
        %v2153 = vmul.f32 %v2116, %v2116
        %v2154 = vmul.f32 %v2117, %v2117
        %v2155 = vmul.f32 %v2118, %v2118
        %v2156 = vmul.f32 %v2119, %v2119
        %v2157 = vmul.f32 %v2120, %v2120
        %v2158 = vmul.f32 %v2121, %v2121
        %v2159 = vmul.f32 %v2122, %v2122
        %v2160 = vmul.f32 %v2123, %v2123
        %v2161 = vmul.f32 %v2124, %v2124
        %v2162 = vmul.f32 %v2125, %v2125
        %v2163 = vadd.f32 %v2147, %v2148
        %v2164 = vadd.f32 %v2163, %v2149
        %v2165 = vadd.f32 %v2164, %v2150
        %v2166 = vadd.f32 %v2165, %v2151
        %v2167 = vadd.f32 %v2166, %v2152
        %v2168 = vadd.f32 %v2167, %v2153
        %v2169 = vadd.f32 %v2168, %v2154
        %v2170 = vadd.f32 %v2169, %v2155
        %v2171 = vadd.f32 %v2170, %v2156
        %v2172 = vadd.f32 %v2171, %v2157
        %v2173 = vadd.f32 %v2172, %v2158
        %v2174 = vadd.f32 %v2173, %v2159
        %v2175 = vadd.f32 %v2174, %v2160
        %v2176 = vadd.f32 %v2175, %v2161
        %v2177 = vadd.f32 %v2176, %v2162
        %v2178 = vrot.slane %v2177, 4
        %v2179 = vadd.f32 %v2177, %v2178
        %v2180 = vrot.slane %v2179, 2
        %v2181 = vadd.f32 %v2179, %v2180
        %v2182 = vrot.slane %v2181, 1
        %v2183 = vadd.f32 %v2181, %v2182
        %v2184 = vmul.f32 %v2146, 0.0078125
        %v2185 = vmul.f32 %v2183, 0.0078125
        %v2186 = vmul.f32 %v2184, %v2184
        %v2187 = vsub.f32 %v2185, %v2186
        %v2188 = vld [vmem:[%s208] sm:$0x1]
        %v2189 = vadd.f32 %v2187, 1e-05
        %v2190 = vrsqrt.pop %v2189
        %v2191 = vmul.f32 %v2188, %v2190
        %v2192 = vld [vmem:[%s211] sm:$0x1]
        %v2193 = vmul.f32 %v2184, %v2191
        %v2194 = vsub.f32 %v2192, %v2193
        %v2196 = vlaneseq
        %v2197 = vshrl.u32 %v2196, 7
        %v2198 = vsub.s32 0, %v2197
        %v2199 = vrot.slane %v2191, %v2198
        %v2201 = vmul.f32 %v2110, %v2199
        %v2202 = vmul.f32 %v2111, %v2199
        %v2203 = vmul.f32 %v2112, %v2199
        %v2204 = vmul.f32 %v2113, %v2199
        %v2205 = vmul.f32 %v2114, %v2199
        %v2206 = vmul.f32 %v2115, %v2199
        %v2207 = vmul.f32 %v2116, %v2199
        %v2208 = vmul.f32 %v2117, %v2199
        %v2209 = vmul.f32 %v2118, %v2199
        %v2210 = vmul.f32 %v2119, %v2199
        %v2211 = vmul.f32 %v2120, %v2199
        %v2212 = vmul.f32 %v2121, %v2199
        %v2213 = vmul.f32 %v2122, %v2199
        %v2214 = vmul.f32 %v2123, %v2199
        %v2215 = vmul.f32 %v2124, %v2199
        %v2216 = vmul.f32 %v2125, %v2199
        %v2218 = vlaneseq
        %v2219 = vshrl.u32 %v2218, 7
        %v2220 = vsub.s32 0, %v2219
        %v2221 = vrot.slane %v2194, %v2220
        %v2223 = vadd.f32 %v2201, %v2221
        %v2224 = vadd.f32 %v2202, %v2221
        %v2225 = vadd.f32 %v2203, %v2221
        %v2226 = vadd.f32 %v2204, %v2221
        %v2227 = vadd.f32 %v2205, %v2221
        %v2228 = vadd.f32 %v2206, %v2221
        %v2229 = vadd.f32 %v2207, %v2221
        %v2230 = vadd.f32 %v2208, %v2221
        %v2231 = vadd.f32 %v2209, %v2221
        %v2232 = vadd.f32 %v2210, %v2221
        %v2233 = vadd.f32 %v2211, %v2221
        %v2234 = vadd.f32 %v2212, %v2221
        %v2235 = vadd.f32 %v2213, %v2221
        %v2236 = vadd.f32 %v2214, %v2221
        %v2237 = vadd.f32 %v2215, %v2221
        %v2238 = vadd.f32 %v2216, %v2221
        %p2239 = scmp.ge.s32.totalorder %s16, 2
        %p2240 = scmp.eq.s32.totalorder %s341, 0
        %p2241 = pnand %p2239, %p2240
        %p2242 = pneg %p2241
        %s2243 = scalar_select %p2242, 1, 0
        %s2244 = scvt.s32.f32 %s2243
        %s2245 = smul.u32 %s342, 320
        %s2246 = sadd.s32 16, %s2245
        %s2247 = scalar_lea.vmem [#allocation2], %s2246
        %v2248 = vld [vmem:[%s2247 + $0x1] sm:$0xff]
        %v2249 = vld [vmem:[%s2247 + $0x11] sm:$0xff]
        %v2250 = vld [vmem:[%s2247 + $0x21] sm:$0xff]
        %v2251 = vld [vmem:[%s2247 + $0x31] sm:$0xff]
        %v2252 = vld [vmem:[%s2247 + $0x41] sm:$0xff]
        %v2253 = vld [vmem:[%s2247 + $0x51] sm:$0xff]
        %v2254 = vld [vmem:[%s2247 + $0x61] sm:$0xff]
        %v2255 = vld [vmem:[%s2247 + $0x71] sm:$0xff]
        %v2256 = vld [vmem:[%s2247 + $0xa1] sm:$0xff]
        %v2257 = vld [vmem:[%s2247 + $0xb1] sm:$0xff]
        %v2258 = vld [vmem:[%s2247 + $0xc1] sm:$0xff]
        %v2259 = vld [vmem:[%s2247 + $0xd1] sm:$0xff]
        %v2260 = vld [vmem:[%s2247 + $0xe1] sm:$0xff]
        %v2261 = vld [vmem:[%s2247 + $0xf1] sm:$0xff]
        %v2262 = vld [vmem:[%s2247 + $0x101] sm:$0xff]
        %v2263 = vld [vmem:[%s2247 + $0x111] sm:$0xff]
        %v2264 = vstv %s2244
        %v2265 = vmul.f32 %v2248, %v2264
        %v2266 = vmul.f32 %v2249, %v2264
        %v2267 = vmul.f32 %v2250, %v2264
        %v2268 = vmul.f32 %v2251, %v2264
        %v2269 = vmul.f32 %v2252, %v2264
        %v2270 = vmul.f32 %v2253, %v2264
        %v2271 = vmul.f32 %v2254, %v2264
        %v2272 = vmul.f32 %v2255, %v2264
        %v2273 = vmul.f32 %v2256, %v2264
        %v2274 = vmul.f32 %v2257, %v2264
        %v2275 = vmul.f32 %v2258, %v2264
        %v2276 = vmul.f32 %v2259, %v2264
        %v2277 = vmul.f32 %v2260, %v2264
        %v2278 = vmul.f32 %v2261, %v2264
        %v2279 = vmul.f32 %v2262, %v2264
        %v2280 = vmul.f32 %v2263, %v2264
        %v2281 = vadd.f32 %v2223, %v2265
        %v2282 = vadd.f32 %v2224, %v2266
        %v2283 = vadd.f32 %v2225, %v2267
        %v2284 = vadd.f32 %v2226, %v2268
        %v2285 = vadd.f32 %v2227, %v2269
        %v2286 = vadd.f32 %v2228, %v2270
        %v2287 = vadd.f32 %v2229, %v2271
        %v2288 = vadd.f32 %v2230, %v2272
        %v2289 = vadd.f32 %v2231, %v2273
        %v2290 = vadd.f32 %v2232, %v2274
        %v2291 = vadd.f32 %v2233, %v2275
        %v2292 = vadd.f32 %v2234, %v2276
        %v2293 = vadd.f32 %v2235, %v2277
        %v2294 = vadd.f32 %v2236, %v2278
        %v2295 = vadd.f32 %v2237, %v2279
        %v2296 = vadd.f32 %v2238, %v2280
        %v2297 = vmax.f32 %v2281, 0.0
        %v2298 = vmax.f32 %v2282, 0.0
        %v2299 = vmax.f32 %v2283, 0.0
        %v2300 = vmax.f32 %v2284, 0.0
        %v2301 = vmax.f32 %v2285, 0.0
        %v2302 = vmax.f32 %v2286, 0.0
        %v2303 = vmax.f32 %v2287, 0.0
        %v2304 = vmax.f32 %v2288, 0.0
        %v2305 = vmax.f32 %v2289, 0.0
        %v2306 = vmax.f32 %v2290, 0.0
        %v2307 = vmax.f32 %v2291, 0.0
        %v2308 = vmax.f32 %v2292, 0.0
        %v2309 = vmax.f32 %v2293, 0.0
        %v2310 = vmax.f32 %v2294, 0.0
        %v2311 = vmax.f32 %v2295, 0.0
        %v2312 = vmax.f32 %v2296, 0.0
        %2313 = vst [vmem:[%s2247 + $0x1] sm:$0xff] %v2297
        %2314 = vst [vmem:[%s2247 + $0x11] sm:$0xff] %v2298
        %2315 = vst [vmem:[%s2247 + $0x21] sm:$0xff] %v2299
        %2316 = vst [vmem:[%s2247 + $0x31] sm:$0xff] %v2300
        %2317 = vst [vmem:[%s2247 + $0x41] sm:$0xff] %v2301
        %2318 = vst [vmem:[%s2247 + $0x51] sm:$0xff] %v2302
        %2319 = vst [vmem:[%s2247 + $0x61] sm:$0xff] %v2303
        %2320 = vst [vmem:[%s2247 + $0x71] sm:$0xff] %v2304
        %2321 = vst [vmem:[%s2247 + $0xa1] sm:$0xff] %v2305
        %2322 = vst [vmem:[%s2247 + $0xb1] sm:$0xff] %v2306
        %2323 = vst [vmem:[%s2247 + $0xc1] sm:$0xff] %v2307
        %2324 = vst [vmem:[%s2247 + $0xd1] sm:$0xff] %v2308
        %2325 = vst [vmem:[%s2247 + $0xe1] sm:$0xff] %v2309
        %2326 = vst [vmem:[%s2247 + $0xf1] sm:$0xff] %v2310
        %2327 = vst [vmem:[%s2247 + $0x101] sm:$0xff] %v2311
        %2328 = vst [vmem:[%s2247 + $0x111] sm:$0xff] %v2312
        %p2329 = scmp.eq.s32.totalorder %s16, 6
        // Predicated region
        $region41: #{backbone_forward.1} parent=35 // pred_check
          %p2330 = pneg %p2329
        $region42: #{backbone_forward.1} parent=35 // pred_check_branch
          %2332 = sbr.rel (%p2330) target = $region44
        $region43: #{backbone_forward.1} parent=35 // pred_region
          %2333 = vst [vmem:[#allocation3] sm:$0xff] %v2297
          %2334 = vst [vmem:[#allocation3 + $0x8] sm:$0xff] %v2298
          %2335 = vst [vmem:[#allocation3 + $0x10] sm:$0xff] %v2299
          %2336 = vst [vmem:[#allocation3 + $0x18] sm:$0xff] %v2300
          %2337 = vst [vmem:[#allocation3 + $0x20] sm:$0xff] %v2301
          %2338 = vst [vmem:[#allocation3 + $0x28] sm:$0xff] %v2302
          %2339 = vst [vmem:[#allocation3 + $0x30] sm:$0xff] %v2303
          %2340 = vst [vmem:[#allocation3 + $0x38] sm:$0xff] %v2304
          %2341 = vst [vmem:[#allocation3 + $0x40] sm:$0xff] %v2305
          %2342 = vst [vmem:[#allocation3 + $0x48] sm:$0xff] %v2306
          %2343 = vst [vmem:[#allocation3 + $0x50] sm:$0xff] %v2307
          %2344 = vst [vmem:[#allocation3 + $0x58] sm:$0xff] %v2308
          %2345 = vst [vmem:[#allocation3 + $0x60] sm:$0xff] %v2309
          %2346 = vst [vmem:[#allocation3 + $0x68] sm:$0xff] %v2310
          %2347 = vst [vmem:[#allocation3 + $0x70] sm:$0xff] %v2311
          %2348 = vst [vmem:[#allocation3 + $0x78] sm:$0xff] %v2312
        $region44: #{backbone_forward.1} parent=35 // pred_fallthru
          _
        // Predicated region
        $region45: #{backbone_forward.1} parent=35 // pred_check
          %p2349 = pneg %p128
        $region46: #{backbone_forward.1} parent=35 // pred_check_branch
          %2351 = sbr.rel (%p2349) target = $region48
        $region47: #{backbone_forward.1} parent=35 // pred_region
          %s2353 = ssub.s32 2048, 2048
          %2354 = vsyncadd [#allocation4], %s2353
          %s2355 = sshll.u32 [#allocation3], 4
          %s2356 = int_to_ptr.vmem [resolvable:$true] %s2355
          %2361 = dma.vmem_to_hbm [thread:$0]  %s2356, 2048, %s4, [#allocation4], 128, 128, 8
        $region48: #{backbone_forward.1} parent=35 // pred_fallthru
          _
        // Predicated region
        $region49: #{backbone_forward.1} parent=35 // pred_check
          %p2362 = pneg %p128
        $region50: #{backbone_forward.1} parent=35 // pred_check_branch
          %2364 = sbr.rel (%p2362) target = $region52
        $region51: #{backbone_forward.1} parent=35 // pred_region
          %2365 = dma.done [#allocation4], 2048
        $region52: #{backbone_forward.1} parent=35 // pred_fallthru
          _
      $region36: #{backbone_forward.1} parent=5 // pred_fallthru
        _
      %p2366 = scmp.le.s32.totalorder 2, %s11
      // Predicated region
      $region53: #{backbone_forward.1} parent=5 // pred_check
        %p2367 = pneg %p2366
      $region54: #{backbone_forward.1} parent=5 // pred_check_branch
        %2369 = sbr.rel (%p2367) target = $region56
      $region55: #{backbone_forward.1} parent=5 // pred_region
        %s2370 = ssub.s32 %s11, 2
      $region56: #{backbone_forward.1} parent=5 // pred_fallthru
        _
    $region6: #{backbone_forward.1} parent=1 // loop_footer
      %s15 = sadd.s32 1, %s11
    $region7: #{backbone_forward.1} parent=1 // loop_footer_branch
      %10 = sbr.rel target = $region3
    $region8: #{backbone_forward.1} parent=1 // loop_exit
      _
    %2371 = vsyncpa [#allocation4], 1
    %s2372 = scalar_lea.sflag [#allocation4], 1
    %2373 = vsyncpa %s2372, 1

</llo_original>
